<compile_context>
chip_gen: v7x
topology: tpu7x:2x2x1
jax: 0.10.0
libtpu: 0.0.40
codegen_flags: <defaults>
</compile_context>

<pallas_src>
import functools

import jax
import jax.numpy as jnp
from jax.experimental import pallas as pl
from jax.experimental.pallas import tpu as pltpu

EPS = 1e-5  # nn.LayerNorm default eps


def transformer_block_kernel(v_ref, k_ref, q_ref,
                             wv_ref, wk_ref, wq_ref,
                             wo_ref, bo_ref,
                             g1_ref, be1_ref,
                             w1_ref, bf1_ref,
                             w2_ref, bf2_ref,
                             g2_ref, be2_ref,
                             o_ref,
                             attn_scratch,
                             *, heads, head_dim, batch_tile, seq, embed):
    H, D, L, E = heads, head_dim, seq, embed
    TB = batch_tile
    R = TB * L

    # (TB, L, E) -> (TB*L, E): leading-dim merge only (layout-free, L % 8 == 0).
    q_f32 = q_ref[...].reshape(R, E)            # f32 copy kept for the residual
    v2 = v_ref[...].reshape(R, E)               # bf16 (cast in the wrapper)
    k2 = k_ref[...].reshape(R, E)
    q2 = q_f32.astype(jnp.bfloat16)

    # Fused per-head projections: block-diagonal pre-transposed (E,E) weights,
    # one lane-dense matmul per tensor.  1/sqrt(E) is already folded into Wq.
    vh = jnp.dot(v2, wv_ref[...], preferred_element_type=jnp.float32).astype(jnp.bfloat16)
    kh = jnp.dot(k2, wk_ref[...], preferred_element_type=jnp.float32).astype(jnp.bfloat16)
    qh = jnp.dot(q2, wq_ref[...], preferred_element_type=jnp.float32).astype(jnp.bfloat16)

    # Per-head attention.  The contraction dim (head_dim) is inherently small;
    # a short static loop of batched 3-D einsums maps straight to the MXU with
    # no in-kernel transposes.  Head outputs land at lane offsets in scratch.
    for h in range(H):
        sl = slice(h * D, (h + 1) * D)
        qhh = qh[:, sl].reshape(TB, L, D)       # leading-dim split: free
        khh = kh[:, sl].reshape(TB, L, D)
        vhh = vh[:, sl].reshape(TB, L, D)

        energy = jnp.einsum('bqd,bkd->bqk', qhh, khh,
                            preferred_element_type=jnp.float32)       # (TB, L, L)
        # TODO(synk): mask path (masked_fill(mask==0, -1e20)) omitted; this
        # kernel matches the PyTorch module for mask=None.
        energy = energy - jnp.max(energy, axis=-1, keepdims=True)
        p = jnp.exp(energy)
        att = p * pl.reciprocal(jnp.sum(p, axis=-1, keepdims=True), approx=True)

        av = jnp.einsum('bqk,bkd->bqd', att.astype(jnp.bfloat16), vhh,
                        preferred_element_type=jnp.float32)           # (TB, L, D)
        attn_scratch[:, sl] = av.reshape(R, D)  # assemble concat(heads) in VMEM

    # fc_out (weight pre-transposed host-side -> no .T in kernel)
    attn = jnp.dot(attn_scratch[...].astype(jnp.bfloat16), wo_ref[...],
                   preferred_element_type=jnp.float32) + bo_ref[...]

    def layernorm(x, gamma, beta):
        mu = jnp.mean(x, axis=-1, keepdims=True)
        var = jnp.mean((x - mu) ** 2, axis=-1, keepdims=True)
        return (x - mu) * jax.lax.rsqrt(var + EPS) * gamma + beta

    # residual + norm1 (f32)
    x = layernorm(attn + q_f32, g1_ref[...], be1_ref[...])            # (R, E)

    # FeedForward (bf16 matmul operands, f32 accumulate / bias / ReLU)
    h1 = jnp.dot(x.astype(jnp.bfloat16), w1_ref[...],
                 preferred_element_type=jnp.float32) + bf1_ref[...]   # (R, FF)
    h1 = jnp.maximum(h1, 0.0)
    ff = jnp.dot(h1.astype(jnp.bfloat16), w2_ref[...],
                 preferred_element_type=jnp.float32) + bf2_ref[...]   # (R, E)

    # residual + norm2
    out = layernorm(ff + x, g2_ref[...], be2_ref[...])
    o_ref[...] = out.reshape(TB, L, E).astype(o_ref.dtype)


def transformer_block(value, key, query, params, *, heads, batch_tile=None):
    N, L, E = query.shape
    D = E // heads
    FF = params["w_fc1"].shape[0]

    # Pick a batch tile: process several batch rows per grid step (amortise the
    # ~0.35 us/step overhead) while keeping >= 2 parallel grid steps when
    # possible (v7x has 2 TensorCores).
    if batch_tile is None:
        batch_tile = 1
        for cand in range(N, 0, -1):
            if N % cand == 0 and N // cand >= 2 and cand * L <= 512:
                batch_tile = cand
                break
    assert N % batch_tile == 0, "batch_tile must divide the batch size"
    TB = batch_tile

    # ---- Host-side weight preparation (tiny, one-off) ----
    scale = 1.0 / (E ** 0.5)

    def blockdiag_t(w):  # (D,D) PyTorch (out,in) -> (E,E) block-diag of w.T
        return jnp.kron(jnp.eye(heads, dtype=w.dtype), w.T)

    wv_bd = blockdiag_t(params["w_v"]).astype(jnp.bfloat16)              # (E, E)
    wk_bd = blockdiag_t(params["w_k"]).astype(jnp.bfloat16)              # (E, E)
    wq_bd = (blockdiag_t(params["w_q"]) * scale).astype(jnp.bfloat16)    # scale folded in

    wo_t = params["w_out"].T.astype(jnp.bfloat16)                        # (E, E)  (in,out)
    w1_t = params["w_fc1"].T.astype(jnp.bfloat16)                        # (E, FF)
    w2_t = params["w_fc2"].T.astype(jnp.bfloat16)                        # (FF, E)

    v_bf = value.astype(jnp.bfloat16)   # matmul-only operands -> bf16 DMA
    k_bf = key.astype(jnp.bfloat16)
    # query stays f32: it also feeds the residual add.

    kernel = functools.partial(transformer_block_kernel,
                               heads=heads, head_dim=D, batch_tile=TB,
                               seq=L, embed=E)

    def act_spec():
        return pl.BlockSpec((TB, L, E), lambda n: (n, 0, 0))

    def const_spec(shape):
        # Constant index_map: Pallas DMAs the block once and keeps it resident.
        return pl.BlockSpec(shape, lambda n: (0,) * len(shape))

    return pl.pallas_call(
        kernel,
        out_shape=jax.ShapeDtypeStruct((N, L, E), jnp.float32),
        grid_spec=pltpu.PrefetchScalarGridSpec(
            num_scalar_prefetch=0,
            grid=(N // TB,),
            in_specs=[
                act_spec(),                 # value (bf16)
                act_spec(),                 # key   (bf16)
                act_spec(),                 # query (f32)
                const_spec((E, E)),         # W_values  block-diag, pre-T, bf16
                const_spec((E, E)),         # W_keys    block-diag, pre-T, bf16
                const_spec((E, E)),         # W_queries block-diag, pre-T, scaled, bf16
                const_spec((E, E)),         # W_fc_out  pre-T, bf16
                const_spec((1, E)),         # b_fc_out  f32
                const_spec((1, E)),         # norm1 gamma
                const_spec((1, E)),         # norm1 beta
                const_spec((E, FF)),        # W_fc1 pre-T, bf16
                const_spec((1, FF)),        # b_fc1 f32
                const_spec((FF, E)),        # W_fc2 pre-T, bf16
                const_spec((1, E)),         # b_fc2 f32
                const_spec((1, E)),         # norm2 gamma
                const_spec((1, E)),         # norm2 beta
            ],
            out_specs=pl.BlockSpec((TB, L, E), lambda n: (n, 0, 0)),
            scratch_shapes=[pltpu.VMEM((TB * L, E), jnp.float32)],
        ),
        compiler_params=pltpu.CompilerParams(
            dimension_semantics=("parallel",),
            vmem_limit_bytes=32 * 1024 * 1024,   # explicit, fits all TPU gens incl. v7x
        ),
    )(v_bf, k_bf, query,
      wv_bd, wk_bd, wq_bd,
      wo_t, params["b_out"],
      params["g1"], params["be1"],
      w1_t, params["b_fc1"],
      w2_t, params["b_fc2"],
      params["g2"], params["be2"])


# -------------------- pure-JAX reference (mirrors the PyTorch forward, f32) --------------------
def reference(value, key, query, params, *, heads):
    N, L, E = query.shape
    D = E // heads

    def split_heads(x):
        return x.reshape(N, L, heads, D)

    v = jnp.einsum('nlhd,ed->nlhe', split_heads(value), params["w_v"])
    k = jnp.einsum('nlhd,ed->nlhe', split_heads(key), params["w_k"])
    q = jnp.einsum('nlhd,ed->nlhe', split_heads(query), params["w_q"])

    energy = jnp.einsum('nqhd,nkhd->nhqk', q, k) / (E ** 0.5)
    att = jax.nn.softmax(energy, axis=3)
    out = jnp.einsum('nhql,nlhd->nqhd', att, v).reshape(N, L, E)
    out = out @ params["w_out"].T + params["b_out"][0]

    def layernorm(x, g, b):
        mu = jnp.mean(x, axis=-1, keepdims=True)
        var = jnp.mean((x - mu) ** 2, axis=-1, keepdims=True)
        return (x - mu) * jax.lax.rsqrt(var + EPS) * g[0] + b[0]

    x = layernorm(out + query, params["g1"], params["be1"])
    h1 = jnp.maximum(x @ params["w_fc1"].T + params["b_fc1"][0], 0.0)
    ff = h1 @ params["w_fc2"].T + params["b_fc2"][0]
    return layernorm(ff + x, params["g2"], params["be2"])


if __name__ == "__main__":
    # Small shapes consistent with the module: batch=4, seq=8, embed=32, heads=4, ff_hidden=64.
    # (batch=4 so the auto-picked batch_tile=2 exercises the multi-row path with 2 parallel steps.)
    N, L, E, H, FF = 4, 8, 32, 4, 64
    D = E // H

    key0 = jax.random.PRNGKey(0)
    ks = jax.random.split(key0, 16)

    value = jax.random.normal(ks[0], (N, L, E), jnp.float32)
    key_ = jax.random.normal(ks[1], (N, L, E), jnp.float32)
    query = jax.random.normal(ks[2], (N, L, E), jnp.float32)

    s = 0.1
    params = {
        "w_v":   s * jax.random.normal(ks[3], (D, D), jnp.float32),
        "w_k":   s * jax.random.normal(ks[4], (D, D), jnp.float32),
        "w_q":   s * jax.random.normal(ks[5], (D, D), jnp.float32),
        "w_out": s * jax.random.normal(ks[6], (E, E), jnp.float32),
        "b_out": s * jax.random.normal(ks[7], (1, E), jnp.float32),
        "g1":    jnp.ones((1, E), jnp.float32),
        "be1":   jnp.zeros((1, E), jnp.float32),
        "w_fc1": s * jax.random.normal(ks[8], (FF, E), jnp.float32),
        "b_fc1": s * jax.random.normal(ks[9], (1, FF), jnp.float32),
        "w_fc2": s * jax.random.normal(ks[10], (E, FF), jnp.float32),
        "b_fc2": s * jax.random.normal(ks[11], (1, E), jnp.float32),
        "g2":    jnp.ones((1, E), jnp.float32),
        "be2":   jnp.zeros((1, E), jnp.float32),
    }

    out = transformer_block(value, key_, query, params, heads=H)
    out = jax.block_until_ready(out)

    ref = reference(value, key_, query, params, heads=H)
    assert out.shape == (N, L, E)
    # bf16 MXU operands (f32 accumulate) -> compare against the f32 reference
    # with a bf16-appropriate tolerance.
    assert jnp.allclose(out, ref, atol=3e-2, rtol=3e-2), "mismatch vs JAX reference"

    print("KERNEL_OK")
</pallas_src>

<mosaic_0001>
module attributes {stable_mosaic.version = 11 : i64} {
  func.func @transformer_block_kernel(%arg0: i32, %arg1: memref<2x8x32xbf16, #tpu.memory_space<vmem>>, %arg2: memref<2x8x32xbf16, #tpu.memory_space<vmem>>, %arg3: memref<2x8x32xf32, #tpu.memory_space<vmem>>, %arg4: memref<32x32xbf16, #tpu.memory_space<vmem>>, %arg5: memref<32x32xbf16, #tpu.memory_space<vmem>>, %arg6: memref<32x32xbf16, #tpu.memory_space<vmem>>, %arg7: memref<32x32xbf16, #tpu.memory_space<vmem>>, %arg8: memref<1x32xf32, #tpu.memory_space<vmem>>, %arg9: memref<1x32xf32, #tpu.memory_space<vmem>>, %arg10: memref<1x32xf32, #tpu.memory_space<vmem>>, %arg11: memref<32x64xbf16, #tpu.memory_space<vmem>>, %arg12: memref<1x64xf32, #tpu.memory_space<vmem>>, %arg13: memref<64x32xbf16, #tpu.memory_space<vmem>>, %arg14: memref<1x32xf32, #tpu.memory_space<vmem>>, %arg15: memref<1x32xf32, #tpu.memory_space<vmem>>, %arg16: memref<1x32xf32, #tpu.memory_space<vmem>>, %arg17: memref<2x8x32xf32, #tpu.memory_space<vmem>>, %arg18: memref<16x32xf32, #tpu.memory_space<vmem>>) attributes {dimension_semantics = [#tpu.dimension_semantics<parallel>], iteration_bounds = array<i64: 2>, scalar_prefetch = 0 : i64, scratch_operands = 1 : i64, tpu.core_type = #tpu.core_type<tc>, window_params = [{transform_indices = @transform_0, window_bounds = array<i64: 2, 8, 32>}, {transform_indices = @transform_1, window_bounds = array<i64: 2, 8, 32>}, {transform_indices = @transform_2, window_bounds = array<i64: 2, 8, 32>}, {pipeline_mode = #tpu.pipeline_mode<synchronous>, transform_indices = @transform_3, window_bounds = array<i64: 32, 32>}, {pipeline_mode = #tpu.pipeline_mode<synchronous>, transform_indices = @transform_4, window_bounds = array<i64: 32, 32>}, {pipeline_mode = #tpu.pipeline_mode<synchronous>, transform_indices = @transform_5, window_bounds = array<i64: 32, 32>}, {pipeline_mode = #tpu.pipeline_mode<synchronous>, transform_indices = @transform_6, window_bounds = array<i64: 32, 32>}, {pipeline_mode = #tpu.pipeline_mode<synchronous>, transform_indices = @transform_7, window_bounds = array<i64: 1, 32>}, {pipeline_mode = #tpu.pipeline_mode<synchronous>, transform_indices = @transform_8, window_bounds = array<i64: 1, 32>}, {pipeline_mode = #tpu.pipeline_mode<synchronous>, transform_indices = @transform_9, window_bounds = array<i64: 1, 32>}, {pipeline_mode = #tpu.pipeline_mode<synchronous>, transform_indices = @transform_10, window_bounds = array<i64: 32, 64>}, {pipeline_mode = #tpu.pipeline_mode<synchronous>, transform_indices = @transform_11, window_bounds = array<i64: 1, 64>}, {pipeline_mode = #tpu.pipeline_mode<synchronous>, transform_indices = @transform_12, window_bounds = array<i64: 64, 32>}, {pipeline_mode = #tpu.pipeline_mode<synchronous>, transform_indices = @transform_13, window_bounds = array<i64: 1, 32>}, {pipeline_mode = #tpu.pipeline_mode<synchronous>, transform_indices = @transform_14, window_bounds = array<i64: 1, 32>}, {pipeline_mode = #tpu.pipeline_mode<synchronous>, transform_indices = @transform_15, window_bounds = array<i64: 1, 32>}, {transform_indices = @transform_16, window_bounds = array<i64: 2, 8, 32>}]} {
    %c0 = arith.constant 0 : index
    %c0_0 = arith.constant 0 : index
    %c0_1 = arith.constant 0 : index
    %0 = vector.load %arg3[%c0, %c0_0, %c0_1] : memref<2x8x32xf32, #tpu.memory_space<vmem>>, vector<2x8x32xf32>
    %1 = vector.shape_cast %0 : vector<2x8x32xf32> to vector<16x32xf32>
    %c0_2 = arith.constant 0 : index
    %c0_3 = arith.constant 0 : index
    %c0_4 = arith.constant 0 : index
    %2 = vector.load %arg1[%c0_2, %c0_3, %c0_4] : memref<2x8x32xbf16, #tpu.memory_space<vmem>>, vector<2x8x32xbf16>
    %3 = vector.shape_cast %2 : vector<2x8x32xbf16> to vector<16x32xbf16>
    %c0_5 = arith.constant 0 : index
    %c0_6 = arith.constant 0 : index
    %c0_7 = arith.constant 0 : index
    %4 = vector.load %arg2[%c0_5, %c0_6, %c0_7] : memref<2x8x32xbf16, #tpu.memory_space<vmem>>, vector<2x8x32xbf16>
    %5 = vector.shape_cast %4 : vector<2x8x32xbf16> to vector<16x32xbf16>
    %6 = arith.truncf %1 : vector<16x32xf32> to vector<16x32xbf16>
    %c0_8 = arith.constant 0 : index
    %c0_9 = arith.constant 0 : index
    %7 = vector.load %arg4[%c0_8, %c0_9] : memref<32x32xbf16, #tpu.memory_space<vmem>>, vector<32x32xbf16>
    %cst = arith.constant dense<0.000000e+00> : vector<16x32xf32>
    %8 = tpu.matmul %3, %7, %cst {dimension_numbers = #tpu.dot_dimension_numbers<[1], [0], [0], [1], [0, 0, 1, 1], [], []>} : vector<16x32xbf16>, vector<32x32xbf16>, vector<16x32xf32> -> vector<16x32xf32>
    %9 = arith.truncf %8 : vector<16x32xf32> to vector<16x32xbf16>
    %c0_10 = arith.constant 0 : index
    %c0_11 = arith.constant 0 : index
    %10 = vector.load %arg5[%c0_10, %c0_11] : memref<32x32xbf16, #tpu.memory_space<vmem>>, vector<32x32xbf16>
    %cst_12 = arith.constant dense<0.000000e+00> : vector<16x32xf32>
    %11 = tpu.matmul %5, %10, %cst_12 {dimension_numbers = #tpu.dot_dimension_numbers<[1], [0], [0], [1], [0, 0, 1, 1], [], []>} : vector<16x32xbf16>, vector<32x32xbf16>, vector<16x32xf32> -> vector<16x32xf32>
    %12 = arith.truncf %11 : vector<16x32xf32> to vector<16x32xbf16>
    %c0_13 = arith.constant 0 : index
    %c0_14 = arith.constant 0 : index
    %13 = vector.load %arg6[%c0_13, %c0_14] : memref<32x32xbf16, #tpu.memory_space<vmem>>, vector<32x32xbf16>
    %cst_15 = arith.constant dense<0.000000e+00> : vector<16x32xf32>
    %14 = tpu.matmul %6, %13, %cst_15 {dimension_numbers = #tpu.dot_dimension_numbers<[1], [0], [0], [1], [0, 0, 1, 1], [], []>} : vector<16x32xbf16>, vector<32x32xbf16>, vector<16x32xf32> -> vector<16x32xf32>
    %15 = arith.truncf %14 : vector<16x32xf32> to vector<16x32xbf16>
    %16 = vector.extract_strided_slice %15 {offsets = [0, 0], sizes = [16, 8], strides = [1, 1]} : vector<16x32xbf16> to vector<16x8xbf16>
    %17 = vector.shape_cast %16 : vector<16x8xbf16> to vector<2x8x8xbf16>
    %18 = vector.extract_strided_slice %12 {offsets = [0, 0], sizes = [16, 8], strides = [1, 1]} : vector<16x32xbf16> to vector<16x8xbf16>
    %19 = vector.shape_cast %18 : vector<16x8xbf16> to vector<2x8x8xbf16>
    %20 = vector.extract_strided_slice %9 {offsets = [0, 0], sizes = [16, 8], strides = [1, 1]} : vector<16x32xbf16> to vector<16x8xbf16>
    %21 = vector.shape_cast %20 : vector<16x8xbf16> to vector<2x8x8xbf16>
    "tpu.trace_start"() <{level = 10 : i32, message = "bqd,bkd->bqk"}> : () -> ()
    %cst_16 = arith.constant dense<0.000000e+00> : vector<2x8x8xf32>
    %22 = tpu.matmul %17, %19, %cst_16 {dimension_numbers = #tpu.dot_dimension_numbers<[2], [2], [1], [1], [0, 0, 0, 1, 1, 1], [0], [0]>} : vector<2x8x8xbf16>, vector<2x8x8xbf16>, vector<2x8x8xf32> -> vector<2x8x8xf32>
    "tpu.trace_stop"() : () -> ()
    %cst_17 = arith.constant dense<0xFF800000> : vector<2x8xf32>
    %23 = vector.multi_reduction <maximumf>, %22, %cst_17 [2] : vector<2x8x8xf32> to vector<2x8xf32>
    %24 = vector.shape_cast %23 : vector<2x8xf32> to vector<2x8x1xf32>
    %25 = vector.broadcast %24 : vector<2x8x1xf32> to vector<2x8x8xf32>
    %26 = arith.subf %22, %25 : vector<2x8x8xf32>
    %27 = math.exp %26 : vector<2x8x8xf32>
    %cst_18 = arith.constant dense<0.000000e+00> : vector<2x8xf32>
    %28 = vector.multi_reduction <add>, %27, %cst_18 [2] : vector<2x8x8xf32> to vector<2x8xf32>
    %29 = vector.shape_cast %28 : vector<2x8xf32> to vector<2x8x1xf32>
    %30 = tpu.reciprocal %29 {approx = true} : vector<2x8x1xf32> -> vector<2x8x1xf32>
    %31 = vector.broadcast %30 : vector<2x8x1xf32> to vector<2x8x8xf32>
    %32 = arith.mulf %27, %31 : vector<2x8x8xf32>
    %33 = arith.truncf %32 : vector<2x8x8xf32> to vector<2x8x8xbf16>
    "tpu.trace_start"() <{level = 10 : i32, message = "bqk,bkd->bqd"}> : () -> ()
    %cst_19 = arith.constant dense<0.000000e+00> : vector<2x8x8xf32>
    %34 = tpu.matmul %33, %21, %cst_19 {dimension_numbers = #tpu.dot_dimension_numbers<[2], [1], [1], [2], [0, 0, 0, 1, 1, 2], [0], [0]>} : vector<2x8x8xbf16>, vector<2x8x8xbf16>, vector<2x8x8xf32> -> vector<2x8x8xf32>
    "tpu.trace_stop"() : () -> ()
    %35 = vector.shape_cast %34 : vector<2x8x8xf32> to vector<16x8xf32>
    %c0_20 = arith.constant 0 : index
    %c0_21 = arith.constant 0 : index
    %36 = vector.load %arg18[%c0_20, %c0_21] : memref<16x32xf32, #tpu.memory_space<vmem>>, vector<16x8xf32>
    tpu.vector_store %arg18[%c0_20, %c0_21], %35 {strides = array<i32>} : memref<16x32xf32, #tpu.memory_space<vmem>>, vector<16x8xf32>,
    %37 = vector.extract_strided_slice %15 {offsets = [0, 8], sizes = [16, 8], strides = [1, 1]} : vector<16x32xbf16> to vector<16x8xbf16>
    %38 = vector.shape_cast %37 : vector<16x8xbf16> to vector<2x8x8xbf16>
    %39 = vector.extract_strided_slice %12 {offsets = [0, 8], sizes = [16, 8], strides = [1, 1]} : vector<16x32xbf16> to vector<16x8xbf16>
    %40 = vector.shape_cast %39 : vector<16x8xbf16> to vector<2x8x8xbf16>
    %41 = vector.extract_strided_slice %9 {offsets = [0, 8], sizes = [16, 8], strides = [1, 1]} : vector<16x32xbf16> to vector<16x8xbf16>
    %42 = vector.shape_cast %41 : vector<16x8xbf16> to vector<2x8x8xbf16>
    "tpu.trace_start"() <{level = 10 : i32, message = "bqd,bkd->bqk"}> : () -> ()
    %cst_22 = arith.constant dense<0.000000e+00> : vector<2x8x8xf32>
    %43 = tpu.matmul %38, %40, %cst_22 {dimension_numbers = #tpu.dot_dimension_numbers<[2], [2], [1], [1], [0, 0, 0, 1, 1, 1], [0], [0]>} : vector<2x8x8xbf16>, vector<2x8x8xbf16>, vector<2x8x8xf32> -> vector<2x8x8xf32>
    "tpu.trace_stop"() : () -> ()
    %cst_23 = arith.constant dense<0xFF800000> : vector<2x8xf32>
    %44 = vector.multi_reduction <maximumf>, %43, %cst_23 [2] : vector<2x8x8xf32> to vector<2x8xf32>
    %45 = vector.shape_cast %44 : vector<2x8xf32> to vector<2x8x1xf32>
    %46 = vector.broadcast %45 : vector<2x8x1xf32> to vector<2x8x8xf32>
    %47 = arith.subf %43, %46 : vector<2x8x8xf32>
    %48 = math.exp %47 : vector<2x8x8xf32>
    %cst_24 = arith.constant dense<0.000000e+00> : vector<2x8xf32>
    %49 = vector.multi_reduction <add>, %48, %cst_24 [2] : vector<2x8x8xf32> to vector<2x8xf32>
    %50 = vector.shape_cast %49 : vector<2x8xf32> to vector<2x8x1xf32>
    %51 = tpu.reciprocal %50 {approx = true} : vector<2x8x1xf32> -> vector<2x8x1xf32>
    %52 = vector.broadcast %51 : vector<2x8x1xf32> to vector<2x8x8xf32>
    %53 = arith.mulf %48, %52 : vector<2x8x8xf32>
    %54 = arith.truncf %53 : vector<2x8x8xf32> to vector<2x8x8xbf16>
    "tpu.trace_start"() <{level = 10 : i32, message = "bqk,bkd->bqd"}> : () -> ()
    %cst_25 = arith.constant dense<0.000000e+00> : vector<2x8x8xf32>
    %55 = tpu.matmul %54, %42, %cst_25 {dimension_numbers = #tpu.dot_dimension_numbers<[2], [1], [1], [2], [0, 0, 0, 1, 1, 2], [0], [0]>} : vector<2x8x8xbf16>, vector<2x8x8xbf16>, vector<2x8x8xf32> -> vector<2x8x8xf32>
    "tpu.trace_stop"() : () -> ()
    %56 = vector.shape_cast %55 : vector<2x8x8xf32> to vector<16x8xf32>
    %c0_26 = arith.constant 0 : index
    %c8 = arith.constant 8 : index
    %57 = vector.load %arg18[%c0_26, %c8] : memref<16x32xf32, #tpu.memory_space<vmem>>, vector<16x8xf32>
    tpu.vector_store %arg18[%c0_26, %c8], %56 {strides = array<i32>} : memref<16x32xf32, #tpu.memory_space<vmem>>, vector<16x8xf32>,
    %58 = vector.extract_strided_slice %15 {offsets = [0, 16], sizes = [16, 8], strides = [1, 1]} : vector<16x32xbf16> to vector<16x8xbf16>
    %59 = vector.shape_cast %58 : vector<16x8xbf16> to vector<2x8x8xbf16>
    %60 = vector.extract_strided_slice %12 {offsets = [0, 16], sizes = [16, 8], strides = [1, 1]} : vector<16x32xbf16> to vector<16x8xbf16>
    %61 = vector.shape_cast %60 : vector<16x8xbf16> to vector<2x8x8xbf16>
    %62 = vector.extract_strided_slice %9 {offsets = [0, 16], sizes = [16, 8], strides = [1, 1]} : vector<16x32xbf16> to vector<16x8xbf16>
    %63 = vector.shape_cast %62 : vector<16x8xbf16> to vector<2x8x8xbf16>
    "tpu.trace_start"() <{level = 10 : i32, message = "bqd,bkd->bqk"}> : () -> ()
    %cst_27 = arith.constant dense<0.000000e+00> : vector<2x8x8xf32>
    %64 = tpu.matmul %59, %61, %cst_27 {dimension_numbers = #tpu.dot_dimension_numbers<[2], [2], [1], [1], [0, 0, 0, 1, 1, 1], [0], [0]>} : vector<2x8x8xbf16>, vector<2x8x8xbf16>, vector<2x8x8xf32> -> vector<2x8x8xf32>
    "tpu.trace_stop"() : () -> ()
    %cst_28 = arith.constant dense<0xFF800000> : vector<2x8xf32>
    %65 = vector.multi_reduction <maximumf>, %64, %cst_28 [2] : vector<2x8x8xf32> to vector<2x8xf32>
    %66 = vector.shape_cast %65 : vector<2x8xf32> to vector<2x8x1xf32>
    %67 = vector.broadcast %66 : vector<2x8x1xf32> to vector<2x8x8xf32>
    %68 = arith.subf %64, %67 : vector<2x8x8xf32>
    %69 = math.exp %68 : vector<2x8x8xf32>
    %cst_29 = arith.constant dense<0.000000e+00> : vector<2x8xf32>
    %70 = vector.multi_reduction <add>, %69, %cst_29 [2] : vector<2x8x8xf32> to vector<2x8xf32>
    %71 = vector.shape_cast %70 : vector<2x8xf32> to vector<2x8x1xf32>
    %72 = tpu.reciprocal %71 {approx = true} : vector<2x8x1xf32> -> vector<2x8x1xf32>
    %73 = vector.broadcast %72 : vector<2x8x1xf32> to vector<2x8x8xf32>
    %74 = arith.mulf %69, %73 : vector<2x8x8xf32>
    %75 = arith.truncf %74 : vector<2x8x8xf32> to vector<2x8x8xbf16>
    "tpu.trace_start"() <{level = 10 : i32, message = "bqk,bkd->bqd"}> : () -> ()
    %cst_30 = arith.constant dense<0.000000e+00> : vector<2x8x8xf32>
    %76 = tpu.matmul %75, %63, %cst_30 {dimension_numbers = #tpu.dot_dimension_numbers<[2], [1], [1], [2], [0, 0, 0, 1, 1, 2], [0], [0]>} : vector<2x8x8xbf16>, vector<2x8x8xbf16>, vector<2x8x8xf32> -> vector<2x8x8xf32>
    "tpu.trace_stop"() : () -> ()
    %77 = vector.shape_cast %76 : vector<2x8x8xf32> to vector<16x8xf32>
    %c0_31 = arith.constant 0 : index
    %c16 = arith.constant 16 : index
    %78 = vector.load %arg18[%c0_31, %c16] : memref<16x32xf32, #tpu.memory_space<vmem>>, vector<16x8xf32>
    tpu.vector_store %arg18[%c0_31, %c16], %77 {strides = array<i32>} : memref<16x32xf32, #tpu.memory_space<vmem>>, vector<16x8xf32>,
    %79 = vector.extract_strided_slice %15 {offsets = [0, 24], sizes = [16, 8], strides = [1, 1]} : vector<16x32xbf16> to vector<16x8xbf16>
    %80 = vector.shape_cast %79 : vector<16x8xbf16> to vector<2x8x8xbf16>
    %81 = vector.extract_strided_slice %12 {offsets = [0, 24], sizes = [16, 8], strides = [1, 1]} : vector<16x32xbf16> to vector<16x8xbf16>
    %82 = vector.shape_cast %81 : vector<16x8xbf16> to vector<2x8x8xbf16>
    %83 = vector.extract_strided_slice %9 {offsets = [0, 24], sizes = [16, 8], strides = [1, 1]} : vector<16x32xbf16> to vector<16x8xbf16>
    %84 = vector.shape_cast %83 : vector<16x8xbf16> to vector<2x8x8xbf16>
    "tpu.trace_start"() <{level = 10 : i32, message = "bqd,bkd->bqk"}> : () -> ()
    %cst_32 = arith.constant dense<0.000000e+00> : vector<2x8x8xf32>
    %85 = tpu.matmul %80, %82, %cst_32 {dimension_numbers = #tpu.dot_dimension_numbers<[2], [2], [1], [1], [0, 0, 0, 1, 1, 1], [0], [0]>} : vector<2x8x8xbf16>, vector<2x8x8xbf16>, vector<2x8x8xf32> -> vector<2x8x8xf32>
    "tpu.trace_stop"() : () -> ()
    %cst_33 = arith.constant dense<0xFF800000> : vector<2x8xf32>
    %86 = vector.multi_reduction <maximumf>, %85, %cst_33 [2] : vector<2x8x8xf32> to vector<2x8xf32>
    %87 = vector.shape_cast %86 : vector<2x8xf32> to vector<2x8x1xf32>
    %88 = vector.broadcast %87 : vector<2x8x1xf32> to vector<2x8x8xf32>
    %89 = arith.subf %85, %88 : vector<2x8x8xf32>
    %90 = math.exp %89 : vector<2x8x8xf32>
    %cst_34 = arith.constant dense<0.000000e+00> : vector<2x8xf32>
    %91 = vector.multi_reduction <add>, %90, %cst_34 [2] : vector<2x8x8xf32> to vector<2x8xf32>
    %92 = vector.shape_cast %91 : vector<2x8xf32> to vector<2x8x1xf32>
    %93 = tpu.reciprocal %92 {approx = true} : vector<2x8x1xf32> -> vector<2x8x1xf32>
    %94 = vector.broadcast %93 : vector<2x8x1xf32> to vector<2x8x8xf32>
    %95 = arith.mulf %90, %94 : vector<2x8x8xf32>
    %96 = arith.truncf %95 : vector<2x8x8xf32> to vector<2x8x8xbf16>
    "tpu.trace_start"() <{level = 10 : i32, message = "bqk,bkd->bqd"}> : () -> ()
    %cst_35 = arith.constant dense<0.000000e+00> : vector<2x8x8xf32>
    %97 = tpu.matmul %96, %84, %cst_35 {dimension_numbers = #tpu.dot_dimension_numbers<[2], [1], [1], [2], [0, 0, 0, 1, 1, 2], [0], [0]>} : vector<2x8x8xbf16>, vector<2x8x8xbf16>, vector<2x8x8xf32> -> vector<2x8x8xf32>
    "tpu.trace_stop"() : () -> ()
    %98 = vector.shape_cast %97 : vector<2x8x8xf32> to vector<16x8xf32>
    %c0_36 = arith.constant 0 : index
    %c24 = arith.constant 24 : index
    %99 = vector.load %arg18[%c0_36, %c24] : memref<16x32xf32, #tpu.memory_space<vmem>>, vector<16x8xf32>
    tpu.vector_store %arg18[%c0_36, %c24], %98 {strides = array<i32>} : memref<16x32xf32, #tpu.memory_space<vmem>>, vector<16x8xf32>,
    %c0_37 = arith.constant 0 : index
    %c0_38 = arith.constant 0 : index
    %100 = vector.load %arg18[%c0_37, %c0_38] : memref<16x32xf32, #tpu.memory_space<vmem>>, vector<16x32xf32>
    %101 = arith.truncf %100 : vector<16x32xf32> to vector<16x32xbf16>
    %c0_39 = arith.constant 0 : index
    %c0_40 = arith.constant 0 : index
    %102 = vector.load %arg7[%c0_39, %c0_40] : memref<32x32xbf16, #tpu.memory_space<vmem>>, vector<32x32xbf16>
    %cst_41 = arith.constant dense<0.000000e+00> : vector<16x32xf32>
    %103 = tpu.matmul %101, %102, %cst_41 {dimension_numbers = #tpu.dot_dimension_numbers<[1], [0], [0], [1], [0, 0, 1, 1], [], []>} : vector<16x32xbf16>, vector<32x32xbf16>, vector<16x32xf32> -> vector<16x32xf32>
    %c0_42 = arith.constant 0 : index
    %c0_43 = arith.constant 0 : index
    %104 = vector.load %arg8[%c0_42, %c0_43] : memref<1x32xf32, #tpu.memory_space<vmem>>, vector<1x32xf32>
    %105 = vector.broadcast %104 : vector<1x32xf32> to vector<16x32xf32>
    %106 = arith.addf %103, %105 : vector<16x32xf32>
    %107 = arith.addf %106, %1 : vector<16x32xf32>
    %c0_44 = arith.constant 0 : index
    %c0_45 = arith.constant 0 : index
    %108 = vector.load %arg9[%c0_44, %c0_45] : memref<1x32xf32, #tpu.memory_space<vmem>>, vector<1x32xf32>
    %c0_46 = arith.constant 0 : index
    %c0_47 = arith.constant 0 : index
    %109 = vector.load %arg10[%c0_46, %c0_47] : memref<1x32xf32, #tpu.memory_space<vmem>>, vector<1x32xf32>
    %cst_48 = arith.constant dense<0.000000e+00> : vector<16xf32>
    %110 = vector.multi_reduction <add>, %107, %cst_48 [1] : vector<16x32xf32> to vector<16xf32>
    %111 = vector.shape_cast %110 : vector<16xf32> to vector<16x1xf32>
    %cst_49 = arith.constant 3.200000e+01 : f32
    %112 = vector.broadcast %cst_49 : f32 to vector<16x1xf32>
    %113 = arith.divf %111, %112 : vector<16x1xf32>
    %114 = vector.broadcast %113 : vector<16x1xf32> to vector<16x32xf32>
    %115 = arith.subf %107, %114 : vector<16x32xf32>
    %116 = arith.mulf %115, %115 : vector<16x32xf32>
    %cst_50 = arith.constant dense<0.000000e+00> : vector<16xf32>
    %117 = vector.multi_reduction <add>, %116, %cst_50 [1] : vector<16x32xf32> to vector<16xf32>
    %118 = vector.shape_cast %117 : vector<16xf32> to vector<16x1xf32>
    %cst_51 = arith.constant 3.200000e+01 : f32
    %119 = vector.broadcast %cst_51 : f32 to vector<16x1xf32>
    %120 = arith.divf %118, %119 : vector<16x1xf32>
    %121 = vector.broadcast %113 : vector<16x1xf32> to vector<16x32xf32>
    %122 = arith.subf %107, %121 : vector<16x32xf32>
    %cst_52 = arith.constant 9.99999974E-6 : f32
    %123 = vector.broadcast %cst_52 : f32 to vector<16x1xf32>
    %124 = arith.addf %120, %123 : vector<16x1xf32>
    %125 = math.rsqrt %124 : vector<16x1xf32>
    %126 = vector.broadcast %125 : vector<16x1xf32> to vector<16x32xf32>
    %127 = arith.mulf %122, %126 : vector<16x32xf32>
    %128 = vector.broadcast %108 : vector<1x32xf32> to vector<16x32xf32>
    %129 = arith.mulf %127, %128 : vector<16x32xf32>
    %130 = vector.broadcast %109 : vector<1x32xf32> to vector<16x32xf32>
    %131 = arith.addf %129, %130 : vector<16x32xf32>
    %132 = arith.truncf %131 : vector<16x32xf32> to vector<16x32xbf16>
    %c0_53 = arith.constant 0 : index
    %c0_54 = arith.constant 0 : index
    %133 = vector.load %arg11[%c0_53, %c0_54] : memref<32x64xbf16, #tpu.memory_space<vmem>>, vector<32x64xbf16>
    %cst_55 = arith.constant dense<0.000000e+00> : vector<16x64xf32>
    %134 = tpu.matmul %132, %133, %cst_55 {dimension_numbers = #tpu.dot_dimension_numbers<[1], [0], [0], [1], [0, 0, 1, 1], [], []>} : vector<16x32xbf16>, vector<32x64xbf16>, vector<16x64xf32> -> vector<16x64xf32>
    %c0_56 = arith.constant 0 : index
    %c0_57 = arith.constant 0 : index
    %135 = vector.load %arg12[%c0_56, %c0_57] : memref<1x64xf32, #tpu.memory_space<vmem>>, vector<1x64xf32>
    %136 = vector.broadcast %135 : vector<1x64xf32> to vector<16x64xf32>
    %137 = arith.addf %134, %136 : vector<16x64xf32>
    %cst_58 = arith.constant 0.000000e+00 : f32
    %138 = vector.broadcast %cst_58 : f32 to vector<16x64xf32>
    %139 = arith.maximumf %137, %138 : vector<16x64xf32>
    %140 = arith.truncf %139 : vector<16x64xf32> to vector<16x64xbf16>
    %c0_59 = arith.constant 0 : index
    %c0_60 = arith.constant 0 : index
    %141 = vector.load %arg13[%c0_59, %c0_60] : memref<64x32xbf16, #tpu.memory_space<vmem>>, vector<64x32xbf16>
    %cst_61 = arith.constant dense<0.000000e+00> : vector<16x32xf32>
    %142 = tpu.matmul %140, %141, %cst_61 {dimension_numbers = #tpu.dot_dimension_numbers<[1], [0], [0], [1], [0, 0, 1, 1], [], []>} : vector<16x64xbf16>, vector<64x32xbf16>, vector<16x32xf32> -> vector<16x32xf32>
    %c0_62 = arith.constant 0 : index
    %c0_63 = arith.constant 0 : index
    %143 = vector.load %arg14[%c0_62, %c0_63] : memref<1x32xf32, #tpu.memory_space<vmem>>, vector<1x32xf32>
    %144 = vector.broadcast %143 : vector<1x32xf32> to vector<16x32xf32>
    %145 = arith.addf %142, %144 : vector<16x32xf32>
    %146 = arith.addf %145, %131 : vector<16x32xf32>
    %c0_64 = arith.constant 0 : index
    %c0_65 = arith.constant 0 : index
    %147 = vector.load %arg15[%c0_64, %c0_65] : memref<1x32xf32, #tpu.memory_space<vmem>>, vector<1x32xf32>
    %c0_66 = arith.constant 0 : index
    %c0_67 = arith.constant 0 : index
    %148 = vector.load %arg16[%c0_66, %c0_67] : memref<1x32xf32, #tpu.memory_space<vmem>>, vector<1x32xf32>
    %cst_68 = arith.constant dense<0.000000e+00> : vector<16xf32>
    %149 = vector.multi_reduction <add>, %146, %cst_68 [1] : vector<16x32xf32> to vector<16xf32>
    %150 = vector.shape_cast %149 : vector<16xf32> to vector<16x1xf32>
    %cst_69 = arith.constant 3.200000e+01 : f32
    %151 = vector.broadcast %cst_69 : f32 to vector<16x1xf32>
    %152 = arith.divf %150, %151 : vector<16x1xf32>
    %153 = vector.broadcast %152 : vector<16x1xf32> to vector<16x32xf32>
    %154 = arith.subf %146, %153 : vector<16x32xf32>
    %155 = arith.mulf %154, %154 : vector<16x32xf32>
    %cst_70 = arith.constant dense<0.000000e+00> : vector<16xf32>
    %156 = vector.multi_reduction <add>, %155, %cst_70 [1] : vector<16x32xf32> to vector<16xf32>
    %157 = vector.shape_cast %156 : vector<16xf32> to vector<16x1xf32>
    %cst_71 = arith.constant 3.200000e+01 : f32
    %158 = vector.broadcast %cst_71 : f32 to vector<16x1xf32>
    %159 = arith.divf %157, %158 : vector<16x1xf32>
    %160 = vector.broadcast %152 : vector<16x1xf32> to vector<16x32xf32>
    %161 = arith.subf %146, %160 : vector<16x32xf32>
    %cst_72 = arith.constant 9.99999974E-6 : f32
    %162 = vector.broadcast %cst_72 : f32 to vector<16x1xf32>
    %163 = arith.addf %159, %162 : vector<16x1xf32>
    %164 = math.rsqrt %163 : vector<16x1xf32>
    %165 = vector.broadcast %164 : vector<16x1xf32> to vector<16x32xf32>
    %166 = arith.mulf %161, %165 : vector<16x32xf32>
    %167 = vector.broadcast %147 : vector<1x32xf32> to vector<16x32xf32>
    %168 = arith.mulf %166, %167 : vector<16x32xf32>
    %169 = vector.broadcast %148 : vector<1x32xf32> to vector<16x32xf32>
    %170 = arith.addf %168, %169 : vector<16x32xf32>
    %171 = vector.shape_cast %170 : vector<16x32xf32> to vector<2x8x32xf32>
    %c0_73 = arith.constant 0 : index
    %c0_74 = arith.constant 0 : index
    %c0_75 = arith.constant 0 : index
    %172 = vector.load %arg17[%c0_73, %c0_74, %c0_75] : memref<2x8x32xf32, #tpu.memory_space<vmem>>, vector<2x8x32xf32>
    tpu.vector_store %arg17[%c0_73, %c0_74, %c0_75], %171 {strides = array<i32>} : memref<2x8x32xf32, #tpu.memory_space<vmem>>, vector<2x8x32xf32>,
    return
  }
  func.func @transform_0(%arg0: i32) -> (i32, i32, i32) {
    %c0_i32 = arith.constant 0 : i32
    %c0_i32_0 = arith.constant 0 : i32
    %c0_i32_1 = arith.constant 0 : i32
    return %arg0, %c0_i32, %c0_i32_0 : i32, i32, i32
  }
  func.func @transform_1(%arg0: i32) -> (i32, i32, i32) {
    %c0_i32 = arith.constant 0 : i32
    %c0_i32_0 = arith.constant 0 : i32
    %c0_i32_1 = arith.constant 0 : i32
    return %arg0, %c0_i32, %c0_i32_0 : i32, i32, i32
  }
  func.func @transform_2(%arg0: i32) -> (i32, i32, i32) {
    %c0_i32 = arith.constant 0 : i32
    %c0_i32_0 = arith.constant 0 : i32
    %c0_i32_1 = arith.constant 0 : i32
    return %arg0, %c0_i32, %c0_i32_0 : i32, i32, i32
  }
  func.func @transform_3(%arg0: i32) -> (i32, i32) {
    %c0_i32 = arith.constant 0 : i32
    %c0_i32_0 = arith.constant 0 : i32
    %c0_i32_1 = arith.constant 0 : i32
    return %c0_i32, %c0_i32_0 : i32, i32
  }
  func.func @transform_4(%arg0: i32) -> (i32, i32) {
    %c0_i32 = arith.constant 0 : i32
    %c0_i32_0 = arith.constant 0 : i32
    %c0_i32_1 = arith.constant 0 : i32
    return %c0_i32, %c0_i32_0 : i32, i32
  }
  func.func @transform_5(%arg0: i32) -> (i32, i32) {
    %c0_i32 = arith.constant 0 : i32
    %c0_i32_0 = arith.constant 0 : i32
    %c0_i32_1 = arith.constant 0 : i32
    return %c0_i32, %c0_i32_0 : i32, i32
  }
  func.func @transform_6(%arg0: i32) -> (i32, i32) {
    %c0_i32 = arith.constant 0 : i32
    %c0_i32_0 = arith.constant 0 : i32
    %c0_i32_1 = arith.constant 0 : i32
    return %c0_i32, %c0_i32_0 : i32, i32
  }
  func.func @transform_7(%arg0: i32) -> (i32, i32) {
    %c0_i32 = arith.constant 0 : i32
    %c0_i32_0 = arith.constant 0 : i32
    %c0_i32_1 = arith.constant 0 : i32
    return %c0_i32, %c0_i32_0 : i32, i32
  }
  func.func @transform_8(%arg0: i32) -> (i32, i32) {
    %c0_i32 = arith.constant 0 : i32
    %c0_i32_0 = arith.constant 0 : i32
    %c0_i32_1 = arith.constant 0 : i32
    return %c0_i32, %c0_i32_0 : i32, i32
  }
  func.func @transform_9(%arg0: i32) -> (i32, i32) {
    %c0_i32 = arith.constant 0 : i32
    %c0_i32_0 = arith.constant 0 : i32
    %c0_i32_1 = arith.constant 0 : i32
    return %c0_i32, %c0_i32_0 : i32, i32
  }
  func.func @transform_10(%arg0: i32) -> (i32, i32) {
    %c0_i32 = arith.constant 0 : i32
    %c0_i32_0 = arith.constant 0 : i32
    %c0_i32_1 = arith.constant 0 : i32
    return %c0_i32, %c0_i32_0 : i32, i32
  }
  func.func @transform_11(%arg0: i32) -> (i32, i32) {
    %c0_i32 = arith.constant 0 : i32
    %c0_i32_0 = arith.constant 0 : i32
    %c0_i32_1 = arith.constant 0 : i32
    return %c0_i32, %c0_i32_0 : i32, i32
  }
  func.func @transform_12(%arg0: i32) -> (i32, i32) {
    %c0_i32 = arith.constant 0 : i32
    %c0_i32_0 = arith.constant 0 : i32
    %c0_i32_1 = arith.constant 0 : i32
    return %c0_i32, %c0_i32_0 : i32, i32
  }
  func.func @transform_13(%arg0: i32) -> (i32, i32) {
    %c0_i32 = arith.constant 0 : i32
    %c0_i32_0 = arith.constant 0 : i32
    %c0_i32_1 = arith.constant 0 : i32
    return %c0_i32, %c0_i32_0 : i32, i32
  }
  func.func @transform_14(%arg0: i32) -> (i32, i32) {
    %c0_i32 = arith.constant 0 : i32
    %c0_i32_0 = arith.constant 0 : i32
    %c0_i32_1 = arith.constant 0 : i32
    return %c0_i32, %c0_i32_0 : i32, i32
  }
  func.func @transform_15(%arg0: i32) -> (i32, i32) {
    %c0_i32 = arith.constant 0 : i32
    %c0_i32_0 = arith.constant 0 : i32
    %c0_i32_1 = arith.constant 0 : i32
    return %c0_i32, %c0_i32_0 : i32, i32
  }
  func.func @transform_16(%arg0: i32) -> (i32, i32, i32) {
    %c0_i32 = arith.constant 0 : i32
    %c0_i32_0 = arith.constant 0 : i32
    %c0_i32_1 = arith.constant 0 : i32
    return %arg0, %c0_i32, %c0_i32_0 : i32, i32, i32
  }
}

</mosaic_0001>

<llo_original>
// kernel: tpu_custom_call.1
$region0: #{tpu_custom_call.1}
  #allocation0 [shape = 'u32[]', space=smem, size = 0x4, offset = 0x4, fixed_abs, tag = 'smem constant byte address 0x4 - core index']
  #allocation1 [shape = 'u32[144,128]{1,0:T(1,128)}', space=vmem, size = 0x12000, scoped, tag = 'internal scratch']
  #allocation2 [shape = 'f32[16,32]{1,0:T(8,128)}', space=vmem, size = 0x2000, scoped, tag = 'scratch operand']
  %s0 = inlined_call_operand.vmem [shape: bf16[4,8,32], index: 0, kind: input, shape index: {}]
  %s1 = inlined_call_operand.hbm [shape: bf16[4,8,32], index: 1, kind: input, shape index: {}]
  %s2 = inlined_call_operand.vmem [shape: f32[4,8,32], index: 2, kind: input, shape index: {}]
  %s3 = inlined_call_operand.hbm [shape: bf16[32,32], index: 3, kind: input, shape index: {}]
  %s4 = inlined_call_operand.hbm [shape: bf16[32,32], index: 4, kind: input, shape index: {}]
  %s5 = inlined_call_operand.hbm [shape: bf16[32,32], index: 5, kind: input, shape index: {}]
  %s6 = inlined_call_operand.hbm [shape: bf16[32,32], index: 6, kind: input, shape index: {}]
  %s7 = inlined_call_operand.vmem [shape: f32[1,32], index: 7, kind: input, shape index: {}]
  %s8 = inlined_call_operand.vmem [shape: f32[1,32], index: 8, kind: input, shape index: {}]
  %s9 = inlined_call_operand.hbm [shape: f32[1,32], index: 9, kind: input, shape index: {}]
  %s10 = inlined_call_operand.vmem [shape: bf16[32,64], index: 10, kind: input, shape index: {}]
  %s11 = inlined_call_operand.vmem [shape: f32[1,64], index: 11, kind: input, shape index: {}]
  %s12 = inlined_call_operand.vmem [shape: bf16[64,32], index: 12, kind: input, shape index: {}]
  %s13 = inlined_call_operand.vmem [shape: f32[1,32], index: 13, kind: input, shape index: {}]
  %s14 = inlined_call_operand.vmem [shape: f32[1,32], index: 14, kind: input, shape index: {}]
  %s15 = inlined_call_operand.vmem [shape: f32[1,32], index: 15, kind: input, shape index: {}]
  %s16 = inlined_call_operand.hbm [shape: f32[4,8,32], index: 16, kind: output, shape index: {}]
  %s17 = sld [smem:[#allocation0]]
  $region121: #{tpu_custom_call.1} parent=0
    _
  %s19 = ssub.s32 1, %s17
  %s20 = scalar_select 0, %s19, %s17
  $region1: #{tpu_custom_call.1} parent=0
    #allocation3 [shape = 'u8[8192]{0}', space=vmem, size = 0x2000, scoped, tag = 'input window, operand 1']
    #allocation4 [shape = 's32[2]{0}', space=sflag, size = 0x8, scoped, tag = 'scoped memory for tpu_custom_call.1']
    #allocation5 [shape = 's32[2]{0}', space=sflag, size = 0x8, scoped, tag = 'scoped memory for tpu_custom_call.1']
    #allocation6 [shape = 'u8[8192]{0}', space=vmem, size = 0x2000, scoped, tag = 'input window, operand 3, single buffered']
    #allocation7 [shape = 's32[1]{0}', space=sflag, size = 0x4, scoped, tag = 'scoped memory for tpu_custom_call.1']
    #allocation8 [shape = 'u8[8192]{0}', space=vmem, size = 0x2000, scoped, tag = 'input window, operand 4, single buffered']
    #allocation9 [shape = 'u8[8192]{0}', space=vmem, size = 0x2000, scoped, tag = 'input window, operand 5, single buffered']
    #allocation10 [shape = 's32[1]{0}', space=sflag, size = 0x4, scoped, tag = 'scoped memory for tpu_custom_call.1']
    #allocation11 [shape = 'u8[8192]{0}', space=vmem, size = 0x2000, scoped, tag = 'input window, operand 6, single buffered']
    #allocation12 [shape = 'u8[512]{0}', space=vmem, size = 0x400, scoped, tag = 'input window, operand 9, single buffered']
    #allocation13 [shape = 's32[1]{0}', space=sflag, size = 0x4, scoped, tag = 'scoped memory for tpu_custom_call.1']
    #allocation14 [shape = 'u8[16384]{0}', space=vmem, size = 0x4000, scoped, tag = 'output window, operand 0']
    %21 = vsyncpa [#allocation4], 0
    %s22 = scalar_lea.sflag [#allocation4], 1
    %23 = vsyncpa %s22, 0
    %24 = vsyncpa [#allocation7], 0
    %25 = vsyncpa [#allocation10], 0
    %26 = vsyncpa [#allocation13], 0
    %27 = vsyncpa [#allocation5], 0
    %s28 = scalar_lea.sflag [#allocation5], 1
    %29 = vsyncpa %s28, 0
    loop: start=0, step=1, limit=4
    $region2: #{tpu_custom_call.1} parent=1 // loop_pre_header
      _
    $region3: #{tpu_custom_call.1} parent=1 // loop_header
      %s31 = sphi 0, %s35
      %p32 = scmp.ge.s32.totalorder %s31, 4
      %s41 = sphi 0, %s43
      %s44 = sphi 0, %s41
      %s45 = sphi 0, %s44
      %s61 = sphi 0, %s45
      %s67 = sphi 0, %s69
      %s70 = sphi 0, %s67
      %s71 = sphi 0, %s70
      %s87 = sphi 0, %s71
      %s93 = sphi 0, %s95
      %s96 = sphi 0, %s93
      %s97 = sphi 0, %s96
      %s113 = sphi 0, %s97
      %s117 = sphi 0, %s117
      %s119 = sphi 0, %s117
      %s120 = sphi 0, %s119
      %s134 = sphi 0, %s120
      %s138 = sphi 0, %s138
      %s140 = sphi 0, %s138
      %s141 = sphi 0, %s140
      %s155 = sphi 0, %s141
      %s159 = sphi 0, %s159
      %s161 = sphi 0, %s159
      %s162 = sphi 0, %s161
      %s176 = sphi 0, %s162
      %s180 = sphi 0, %s180
      %s182 = sphi 0, %s180
      %s183 = sphi 0, %s182
      %s197 = sphi 0, %s183
      %s201 = sphi 0, %s201
      %s203 = sphi 0, %s201
      %s204 = sphi 0, %s203
      %s218 = sphi 0, %s204
      %s222 = sphi 0, %s222
      %s224 = sphi 0, %s222
      %s225 = sphi 0, %s224
      %s239 = sphi 0, %s225
      %s243 = sphi 0, %s243
      %s245 = sphi 0, %s243
      %s246 = sphi 0, %s245
      %s260 = sphi 0, %s246
      %s264 = sphi 0, %s264
      %s266 = sphi 0, %s264
      %s267 = sphi 0, %s266
      %s281 = sphi 0, %s267
      %s285 = sphi 0, %s285
      %s287 = sphi 0, %s285
      %s288 = sphi 0, %s287
      %s302 = sphi 0, %s288
      %s306 = sphi 0, %s306
      %s308 = sphi 0, %s306
      %s309 = sphi 0, %s308
      %s323 = sphi 0, %s309
      %s327 = sphi 0, %s327
      %s329 = sphi 0, %s327
      %s330 = sphi 0, %s329
      %s344 = sphi 0, %s330
      %s348 = sphi 0, %s348
      %s350 = sphi 0, %s348
      %s351 = sphi 0, %s350
      %s365 = sphi 0, %s351
      %s369 = sphi 0, %s369
      %s371 = sphi 0, %s369
      %s372 = sphi 0, %s371
      %s386 = sphi 0, %s372
      %s392 = sphi 0, %s394
      %s395 = sphi 0, %s392
      %s396 = sphi 0, %s395
      %s412 = sphi 0, %s396
    $region4: #{tpu_custom_call.1} parent=1 // loop_header_branch
      %34 = sbr.rel (%p32) target = $region8
    $region5: #{tpu_custom_call.1} parent=1 // loop_body
      %s36 = ssub.s32 %s31, 1
      %s37 = ssub.s32 %s31, 2
      %s38 = sadd.s32 %s31, 1
      %s39 = ssub.s32 %s31, %s38
      %p40 = scmp.eq.s32.totalorder %s39, 0
      %s42 = sadd.s32 %s41, 1
      %s43 = scalar_select %p40, %s41, %s42
      %p46 = pneg %p40
      %p47 = scmp.eq.s32.totalorder %s31, 1
      %p48 = por %p46, %p47
      %p49 = scmp.ne.s32.totalorder %s41, %s44
      %p50 = scmp.eq.s32.totalorder %s31, 0
      %p51 = por %p49, %p50
      %p52 = scmp.ne.s32.totalorder %s41, %s44
      %p53 = scmp.eq.s32.totalorder %s36, 1
      %p54 = por %p52, %p53
      %p55 = scmp.ne.s32.totalorder %s44, %s45
      %p56 = scmp.eq.s32.totalorder %s36, 0
      %p57 = por %p55, %p56
      %p58 = scmp.ne.s32.totalorder %s44, %s45
      %p59 = scmp.eq.s32.totalorder %s37, 1
      %p60 = por %p58, %p59
      %p62 = scmp.ne.s32.totalorder %s45, %s61
      %p63 = scmp.eq.s32.totalorder %s37, 0
      %p64 = por %p62, %p63
      %s65 = ssub.s32 %s31, %s38
      %p66 = scmp.eq.s32.totalorder %s65, 0
      %s68 = sadd.s32 %s67, 1
      %s69 = scalar_select %p66, %s67, %s68
      %p72 = pneg %p66
      %p73 = scmp.eq.s32.totalorder %s31, 1
      %p74 = por %p72, %p73
      %p75 = scmp.ne.s32.totalorder %s67, %s70
      %p76 = scmp.eq.s32.totalorder %s31, 0
      %p77 = por %p75, %p76
      %p78 = scmp.ne.s32.totalorder %s67, %s70
      %p79 = scmp.eq.s32.totalorder %s36, 1
      %p80 = por %p78, %p79
      %p81 = scmp.ne.s32.totalorder %s70, %s71
      %p82 = scmp.eq.s32.totalorder %s36, 0
      %p83 = por %p81, %p82
      %p84 = scmp.ne.s32.totalorder %s70, %s71
      %p85 = scmp.eq.s32.totalorder %s37, 1
      %p86 = por %p84, %p85
      %p88 = scmp.ne.s32.totalorder %s71, %s87
      %p89 = scmp.eq.s32.totalorder %s37, 0
      %p90 = por %p88, %p89
      %s91 = ssub.s32 %s31, %s38
      %p92 = scmp.eq.s32.totalorder %s91, 0
      %s94 = sadd.s32 %s93, 1
      %s95 = scalar_select %p92, %s93, %s94
      %p98 = pneg %p92
      %p99 = scmp.eq.s32.totalorder %s31, 1
      %p100 = por %p98, %p99
      %p101 = scmp.ne.s32.totalorder %s93, %s96
      %p102 = scmp.eq.s32.totalorder %s31, 0
      %p103 = por %p101, %p102
      %p104 = scmp.ne.s32.totalorder %s93, %s96
      %p105 = scmp.eq.s32.totalorder %s36, 1
      %p106 = por %p104, %p105
      %p107 = scmp.ne.s32.totalorder %s96, %s97
      %p108 = scmp.eq.s32.totalorder %s36, 0
      %p109 = por %p107, %p108
      %p110 = scmp.ne.s32.totalorder %s96, %s97
      %p111 = scmp.eq.s32.totalorder %s37, 1
      %p112 = por %p110, %p111
      %p114 = scmp.ne.s32.totalorder %s97, %s113
      %p115 = scmp.eq.s32.totalorder %s37, 0
      %p116 = por %p114, %p115
      %s118 = sadd.s32 %s117, 1
      %p121 = scmp.eq.s32.totalorder %s31, 1
      %p122 = scmp.ne.s32.totalorder %s117, %s119
      %p123 = scmp.eq.s32.totalorder %s31, 0
      %p124 = por %p122, %p123
      %p125 = scmp.ne.s32.totalorder %s117, %s119
      %p126 = scmp.eq.s32.totalorder %s36, 1
      %p127 = por %p125, %p126
      %p128 = scmp.ne.s32.totalorder %s119, %s120
      %p129 = scmp.eq.s32.totalorder %s36, 0
      %p130 = por %p128, %p129
      %p131 = scmp.ne.s32.totalorder %s119, %s120
      %p132 = scmp.eq.s32.totalorder %s37, 1
      %p133 = por %p131, %p132
      %p135 = scmp.ne.s32.totalorder %s120, %s134
      %p136 = scmp.eq.s32.totalorder %s37, 0
      %p137 = por %p135, %p136
      %s139 = sadd.s32 %s138, 1
      %p142 = scmp.eq.s32.totalorder %s31, 1
      %p143 = scmp.ne.s32.totalorder %s138, %s140
      %p144 = scmp.eq.s32.totalorder %s31, 0
      %p145 = por %p143, %p144
      %p146 = scmp.ne.s32.totalorder %s138, %s140
      %p147 = scmp.eq.s32.totalorder %s36, 1
      %p148 = por %p146, %p147
      %p149 = scmp.ne.s32.totalorder %s140, %s141
      %p150 = scmp.eq.s32.totalorder %s36, 0
      %p151 = por %p149, %p150
      %p152 = scmp.ne.s32.totalorder %s140, %s141
      %p153 = scmp.eq.s32.totalorder %s37, 1
      %p154 = por %p152, %p153
      %p156 = scmp.ne.s32.totalorder %s141, %s155
      %p157 = scmp.eq.s32.totalorder %s37, 0
      %p158 = por %p156, %p157
      %s160 = sadd.s32 %s159, 1
      %p163 = scmp.eq.s32.totalorder %s31, 1
      %p164 = scmp.ne.s32.totalorder %s159, %s161
      %p165 = scmp.eq.s32.totalorder %s31, 0
      %p166 = por %p164, %p165
      %p167 = scmp.ne.s32.totalorder %s159, %s161
      %p168 = scmp.eq.s32.totalorder %s36, 1
      %p169 = por %p167, %p168
      %p170 = scmp.ne.s32.totalorder %s161, %s162
      %p171 = scmp.eq.s32.totalorder %s36, 0
      %p172 = por %p170, %p171
      %p173 = scmp.ne.s32.totalorder %s161, %s162
      %p174 = scmp.eq.s32.totalorder %s37, 1
      %p175 = por %p173, %p174
      %p177 = scmp.ne.s32.totalorder %s162, %s176
      %p178 = scmp.eq.s32.totalorder %s37, 0
      %p179 = por %p177, %p178
      %s181 = sadd.s32 %s180, 1
      %p184 = scmp.eq.s32.totalorder %s31, 1
      %p185 = scmp.ne.s32.totalorder %s180, %s182
      %p186 = scmp.eq.s32.totalorder %s31, 0
      %p187 = por %p185, %p186
      %p188 = scmp.ne.s32.totalorder %s180, %s182
      %p189 = scmp.eq.s32.totalorder %s36, 1
      %p190 = por %p188, %p189
      %p191 = scmp.ne.s32.totalorder %s182, %s183
      %p192 = scmp.eq.s32.totalorder %s36, 0
      %p193 = por %p191, %p192
      %p194 = scmp.ne.s32.totalorder %s182, %s183
      %p195 = scmp.eq.s32.totalorder %s37, 1
      %p196 = por %p194, %p195
      %p198 = scmp.ne.s32.totalorder %s183, %s197
      %p199 = scmp.eq.s32.totalorder %s37, 0
      %p200 = por %p198, %p199
      %s202 = sadd.s32 %s201, 1
      %p205 = scmp.eq.s32.totalorder %s31, 1
      %p206 = scmp.ne.s32.totalorder %s201, %s203
      %p207 = scmp.eq.s32.totalorder %s31, 0
      %p208 = por %p206, %p207
      %p209 = scmp.ne.s32.totalorder %s201, %s203
      %p210 = scmp.eq.s32.totalorder %s36, 1
      %p211 = por %p209, %p210
      %p212 = scmp.ne.s32.totalorder %s203, %s204
      %p213 = scmp.eq.s32.totalorder %s36, 0
      %p214 = por %p212, %p213
      %p215 = scmp.ne.s32.totalorder %s203, %s204
      %p216 = scmp.eq.s32.totalorder %s37, 1
      %p217 = por %p215, %p216
      %p219 = scmp.ne.s32.totalorder %s204, %s218
      %p220 = scmp.eq.s32.totalorder %s37, 0
      %p221 = por %p219, %p220
      %s223 = sadd.s32 %s222, 1
      %p226 = scmp.eq.s32.totalorder %s31, 1
      %p227 = scmp.ne.s32.totalorder %s222, %s224
      %p228 = scmp.eq.s32.totalorder %s31, 0
      %p229 = por %p227, %p228
      %p230 = scmp.ne.s32.totalorder %s222, %s224
      %p231 = scmp.eq.s32.totalorder %s36, 1
      %p232 = por %p230, %p231
      %p233 = scmp.ne.s32.totalorder %s224, %s225
      %p234 = scmp.eq.s32.totalorder %s36, 0
      %p235 = por %p233, %p234
      %p236 = scmp.ne.s32.totalorder %s224, %s225
      %p237 = scmp.eq.s32.totalorder %s37, 1
      %p238 = por %p236, %p237
      %p240 = scmp.ne.s32.totalorder %s225, %s239
      %p241 = scmp.eq.s32.totalorder %s37, 0
      %p242 = por %p240, %p241
      %s244 = sadd.s32 %s243, 1
      %p247 = scmp.eq.s32.totalorder %s31, 1
      %p248 = scmp.ne.s32.totalorder %s243, %s245
      %p249 = scmp.eq.s32.totalorder %s31, 0
      %p250 = por %p248, %p249
      %p251 = scmp.ne.s32.totalorder %s243, %s245
      %p252 = scmp.eq.s32.totalorder %s36, 1
      %p253 = por %p251, %p252
      %p254 = scmp.ne.s32.totalorder %s245, %s246
      %p255 = scmp.eq.s32.totalorder %s36, 0
      %p256 = por %p254, %p255
      %p257 = scmp.ne.s32.totalorder %s245, %s246
      %p258 = scmp.eq.s32.totalorder %s37, 1
      %p259 = por %p257, %p258
      %p261 = scmp.ne.s32.totalorder %s246, %s260
      %p262 = scmp.eq.s32.totalorder %s37, 0
      %p263 = por %p261, %p262
      %s265 = sadd.s32 %s264, 1
      %p268 = scmp.eq.s32.totalorder %s31, 1
      %p269 = scmp.ne.s32.totalorder %s264, %s266
      %p270 = scmp.eq.s32.totalorder %s31, 0
      %p271 = por %p269, %p270
      %p272 = scmp.ne.s32.totalorder %s264, %s266
      %p273 = scmp.eq.s32.totalorder %s36, 1
      %p274 = por %p272, %p273
      %p275 = scmp.ne.s32.totalorder %s266, %s267
      %p276 = scmp.eq.s32.totalorder %s36, 0
      %p277 = por %p275, %p276
      %p278 = scmp.ne.s32.totalorder %s266, %s267
      %p279 = scmp.eq.s32.totalorder %s37, 1
      %p280 = por %p278, %p279
      %p282 = scmp.ne.s32.totalorder %s267, %s281
      %p283 = scmp.eq.s32.totalorder %s37, 0
      %p284 = por %p282, %p283
      %s286 = sadd.s32 %s285, 1
      %p289 = scmp.eq.s32.totalorder %s31, 1
      %p290 = scmp.ne.s32.totalorder %s285, %s287
      %p291 = scmp.eq.s32.totalorder %s31, 0
      %p292 = por %p290, %p291
      %p293 = scmp.ne.s32.totalorder %s285, %s287
      %p294 = scmp.eq.s32.totalorder %s36, 1
      %p295 = por %p293, %p294
      %p296 = scmp.ne.s32.totalorder %s287, %s288
      %p297 = scmp.eq.s32.totalorder %s36, 0
      %p298 = por %p296, %p297
      %p299 = scmp.ne.s32.totalorder %s287, %s288
      %p300 = scmp.eq.s32.totalorder %s37, 1
      %p301 = por %p299, %p300
      %p303 = scmp.ne.s32.totalorder %s288, %s302
      %p304 = scmp.eq.s32.totalorder %s37, 0
      %p305 = por %p303, %p304
      %s307 = sadd.s32 %s306, 1
      %p310 = scmp.eq.s32.totalorder %s31, 1
      %p311 = scmp.ne.s32.totalorder %s306, %s308
      %p312 = scmp.eq.s32.totalorder %s31, 0
      %p313 = por %p311, %p312
      %p314 = scmp.ne.s32.totalorder %s306, %s308
      %p315 = scmp.eq.s32.totalorder %s36, 1
      %p316 = por %p314, %p315
      %p317 = scmp.ne.s32.totalorder %s308, %s309
      %p318 = scmp.eq.s32.totalorder %s36, 0
      %p319 = por %p317, %p318
      %p320 = scmp.ne.s32.totalorder %s308, %s309
      %p321 = scmp.eq.s32.totalorder %s37, 1
      %p322 = por %p320, %p321
      %p324 = scmp.ne.s32.totalorder %s309, %s323
      %p325 = scmp.eq.s32.totalorder %s37, 0
      %p326 = por %p324, %p325
      %s328 = sadd.s32 %s327, 1
      %p331 = scmp.eq.s32.totalorder %s31, 1
      %p332 = scmp.ne.s32.totalorder %s327, %s329
      %p333 = scmp.eq.s32.totalorder %s31, 0
      %p334 = por %p332, %p333
      %p335 = scmp.ne.s32.totalorder %s327, %s329
      %p336 = scmp.eq.s32.totalorder %s36, 1
      %p337 = por %p335, %p336
      %p338 = scmp.ne.s32.totalorder %s329, %s330
      %p339 = scmp.eq.s32.totalorder %s36, 0
      %p340 = por %p338, %p339
      %p341 = scmp.ne.s32.totalorder %s329, %s330
      %p342 = scmp.eq.s32.totalorder %s37, 1
      %p343 = por %p341, %p342
      %p345 = scmp.ne.s32.totalorder %s330, %s344
      %p346 = scmp.eq.s32.totalorder %s37, 0
      %p347 = por %p345, %p346
      %s349 = sadd.s32 %s348, 1
      %p352 = scmp.eq.s32.totalorder %s31, 1
      %p353 = scmp.ne.s32.totalorder %s348, %s350
      %p354 = scmp.eq.s32.totalorder %s31, 0
      %p355 = por %p353, %p354
      %p356 = scmp.ne.s32.totalorder %s348, %s350
      %p357 = scmp.eq.s32.totalorder %s36, 1
      %p358 = por %p356, %p357
      %p359 = scmp.ne.s32.totalorder %s350, %s351
      %p360 = scmp.eq.s32.totalorder %s36, 0
      %p361 = por %p359, %p360
      %p362 = scmp.ne.s32.totalorder %s350, %s351
      %p363 = scmp.eq.s32.totalorder %s37, 1
      %p364 = por %p362, %p363
      %p366 = scmp.ne.s32.totalorder %s351, %s365
      %p367 = scmp.eq.s32.totalorder %s37, 0
      %p368 = por %p366, %p367
      %s370 = sadd.s32 %s369, 1
      %p373 = scmp.eq.s32.totalorder %s31, 1
      %p374 = scmp.ne.s32.totalorder %s369, %s371
      %p375 = scmp.eq.s32.totalorder %s31, 0
      %p376 = por %p374, %p375
      %p377 = scmp.ne.s32.totalorder %s369, %s371
      %p378 = scmp.eq.s32.totalorder %s36, 1
      %p379 = por %p377, %p378
      %p380 = scmp.ne.s32.totalorder %s371, %s372
      %p381 = scmp.eq.s32.totalorder %s36, 0
      %p382 = por %p380, %p381
      %p383 = scmp.ne.s32.totalorder %s371, %s372
      %p384 = scmp.eq.s32.totalorder %s37, 1
      %p385 = por %p383, %p384
      %p387 = scmp.ne.s32.totalorder %s372, %s386
      %p388 = scmp.eq.s32.totalorder %s37, 0
      %p389 = por %p387, %p388
      %s390 = ssub.s32 %s31, %s38
      %p391 = scmp.eq.s32.totalorder %s390, 0
      %s393 = sadd.s32 %s392, 1
      %s394 = scalar_select %p391, %s392, %s393
      %p397 = pneg %p391
      %p398 = scmp.eq.s32.totalorder %s31, 1
      %p399 = por %p397, %p398
      %p400 = scmp.ne.s32.totalorder %s392, %s395
      %p401 = scmp.eq.s32.totalorder %s31, 0
      %p402 = por %p400, %p401
      %p403 = scmp.ne.s32.totalorder %s392, %s395
      %p404 = scmp.eq.s32.totalorder %s36, 1
      %p405 = por %p403, %p404
      %p406 = scmp.ne.s32.totalorder %s395, %s396
      %p407 = scmp.eq.s32.totalorder %s36, 0
      %p408 = por %p406, %p407
      %p409 = scmp.ne.s32.totalorder %s395, %s396
      %p410 = scmp.eq.s32.totalorder %s37, 1
      %p411 = por %p409, %p410
      %p413 = scmp.ne.s32.totalorder %s396, %s412
      %p414 = scmp.eq.s32.totalorder %s37, 0
      %p415 = por %p413, %p414
      %p416 = scmp.le.s32.totalorder 1, %s31
      %p417 = scmp.lt.s32.totalorder %s31, 3
      %p418 = pnand %p416, %p417
      %p419 = pneg %p418
      // Predicated region
      $region9: #{tpu_custom_call.1} parent=5 // pred_check
        _
      $region10: #{tpu_custom_call.1} parent=5 // pred_check_branch
        %421 = sbr.rel (%p418) target = $region12
      $region11: #{tpu_custom_call.1} parent=5 // pred_region
        %s422 = ssub.s32 %s31, 1
        // Predicated region
        $region13: #{tpu_custom_call.1} parent=11 // pred_check
          %p423 = pneg %p130
        $region14: #{tpu_custom_call.1} parent=11 // pred_check_branch
          %425 = sbr.rel (%p423) target = $region16
        $region15: #{tpu_custom_call.1} parent=11 // pred_region
          %s427 = ssub.s32 256, 256
          %428 = vsyncadd [#allocation7], %s427
          %s429 = sshll.u32 [#allocation6], 4
          %s430 = int_to_ptr.vmem [resolvable:$true] %s429
          %435 = dma.hbm_to_vmem [thread:$0]  %s3, 256, %s430, [#allocation7], 64, 64, 4
        $region16: #{tpu_custom_call.1} parent=11 // pred_fallthru
          _
        // Predicated region
        $region17: #{tpu_custom_call.1} parent=11 // pred_check
          %p436 = pneg %p151
        $region18: #{tpu_custom_call.1} parent=11 // pred_check_branch
          %438 = sbr.rel (%p436) target = $region20
        $region19: #{tpu_custom_call.1} parent=11 // pred_region
          %s440 = ssub.s32 256, 256
          %441 = vsyncadd [#allocation7], %s440
          %s442 = sshll.u32 [#allocation8], 4
          %s443 = int_to_ptr.vmem [resolvable:$true] %s442
          %448 = dma.hbm_to_vmem [thread:$0]  %s4, 256, %s443, [#allocation7], 64, 64, 4
        $region20: #{tpu_custom_call.1} parent=11 // pred_fallthru
          _
        // Predicated region
        $region21: #{tpu_custom_call.1} parent=11 // pred_check
          %p449 = pneg %p172
        $region22: #{tpu_custom_call.1} parent=11 // pred_check_branch
          %451 = sbr.rel (%p449) target = $region24
        $region23: #{tpu_custom_call.1} parent=11 // pred_region
          %s453 = ssub.s32 256, 256
          %454 = vsyncadd [#allocation10], %s453
          %s455 = sshll.u32 [#allocation9], 4
          %s456 = int_to_ptr.vmem [resolvable:$true] %s455
          %461 = dma.hbm_to_vmem [thread:$0]  %s5, 256, %s456, [#allocation10], 64, 64, 4
        $region24: #{tpu_custom_call.1} parent=11 // pred_fallthru
          _
        // Predicated region
        $region25: #{tpu_custom_call.1} parent=11 // pred_check
          %p462 = pneg %p193
        $region26: #{tpu_custom_call.1} parent=11 // pred_check_branch
          %464 = sbr.rel (%p462) target = $region28
        $region27: #{tpu_custom_call.1} parent=11 // pred_region
          %s466 = ssub.s32 256, 256
          %467 = vsyncadd [#allocation10], %s466
          %s468 = sshll.u32 [#allocation11], 4
          %s469 = int_to_ptr.vmem [resolvable:$true] %s468
          %474 = dma.hbm_to_vmem [thread:$0]  %s6, 256, %s469, [#allocation10], 64, 64, 4
        $region28: #{tpu_custom_call.1} parent=11 // pred_fallthru
          _
        // Predicated region
        $region29: #{tpu_custom_call.1} parent=11 // pred_check
          %p475 = pneg %p214
        $region30: #{tpu_custom_call.1} parent=11 // pred_check_branch
          %477 = sbr.rel (%p475) target = $region32
        $region31: #{tpu_custom_call.1} parent=11 // pred_region
          _
        $region32: #{tpu_custom_call.1} parent=11 // pred_fallthru
          _
        // Predicated region
        $region33: #{tpu_custom_call.1} parent=11 // pred_check
          %p478 = pneg %p235
        $region34: #{tpu_custom_call.1} parent=11 // pred_check_branch
          %480 = sbr.rel (%p478) target = $region36
        $region35: #{tpu_custom_call.1} parent=11 // pred_region
          _
        $region36: #{tpu_custom_call.1} parent=11 // pred_fallthru
          _
        // Predicated region
        $region37: #{tpu_custom_call.1} parent=11 // pred_check
          %p481 = pneg %p256
        $region38: #{tpu_custom_call.1} parent=11 // pred_check_branch
          %483 = sbr.rel (%p481) target = $region40
        $region39: #{tpu_custom_call.1} parent=11 // pred_region
          %s485 = ssub.s32 16, 16
          %486 = vsyncadd [#allocation13], %s485
          %s488 = sshll.u32 [#allocation12], 4
          %s489 = int_to_ptr.vmem [resolvable:$true] %s488
          %491 = dma.hbm_to_vmem [thread:$0]  %s9, 16, %s489, [#allocation13]
        $region40: #{tpu_custom_call.1} parent=11 // pred_fallthru
          _
        // Predicated region
        $region41: #{tpu_custom_call.1} parent=11 // pred_check
          %p492 = pneg %p277
        $region42: #{tpu_custom_call.1} parent=11 // pred_check_branch
          %494 = sbr.rel (%p492) target = $region44
        $region43: #{tpu_custom_call.1} parent=11 // pred_region
          _
        $region44: #{tpu_custom_call.1} parent=11 // pred_fallthru
          _
        // Predicated region
        $region45: #{tpu_custom_call.1} parent=11 // pred_check
          %p495 = pneg %p298
        $region46: #{tpu_custom_call.1} parent=11 // pred_check_branch
          %497 = sbr.rel (%p495) target = $region48
        $region47: #{tpu_custom_call.1} parent=11 // pred_region
          _
        $region48: #{tpu_custom_call.1} parent=11 // pred_fallthru
          _
        // Predicated region
        $region49: #{tpu_custom_call.1} parent=11 // pred_check
          %p498 = pneg %p319
        $region50: #{tpu_custom_call.1} parent=11 // pred_check_branch
          %500 = sbr.rel (%p498) target = $region52
        $region51: #{tpu_custom_call.1} parent=11 // pred_region
          _
        $region52: #{tpu_custom_call.1} parent=11 // pred_fallthru
          _
        // Predicated region
        $region53: #{tpu_custom_call.1} parent=11 // pred_check
          %p501 = pneg %p340
        $region54: #{tpu_custom_call.1} parent=11 // pred_check_branch
          %503 = sbr.rel (%p501) target = $region56
        $region55: #{tpu_custom_call.1} parent=11 // pred_region
          _
        $region56: #{tpu_custom_call.1} parent=11 // pred_fallthru
          _
        // Predicated region
        $region57: #{tpu_custom_call.1} parent=11 // pred_check
          %p504 = pneg %p361
        $region58: #{tpu_custom_call.1} parent=11 // pred_check_branch
          %506 = sbr.rel (%p504) target = $region60
        $region59: #{tpu_custom_call.1} parent=11 // pred_region
          _
        $region60: #{tpu_custom_call.1} parent=11 // pred_fallthru
          _
        // Predicated region
        $region61: #{tpu_custom_call.1} parent=11 // pred_check
          %p507 = pneg %p382
        $region62: #{tpu_custom_call.1} parent=11 // pred_check_branch
          %509 = sbr.rel (%p507) target = $region64
        $region63: #{tpu_custom_call.1} parent=11 // pred_region
          _
        $region64: #{tpu_custom_call.1} parent=11 // pred_fallthru
          _
      $region12: #{tpu_custom_call.1} parent=5 // pred_fallthru
        _
      %p510 = scmp.lt.s32.totalorder %s31, 2
      // Predicated region
      $region65: #{tpu_custom_call.1} parent=5 // pred_check
        %p511 = pneg %p510
      $region66: #{tpu_custom_call.1} parent=5 // pred_check_branch
        %513 = sbr.rel (%p511) target = $region68
      $region67: #{tpu_custom_call.1} parent=5 // pred_region
        // Predicated region
        $region69: #{tpu_custom_call.1} parent=67 // pred_check
          %p514 = pneg %p51
        $region70: #{tpu_custom_call.1} parent=67 // pred_check_branch
          %516 = sbr.rel (%p514) target = $region72
        $region71: #{tpu_custom_call.1} parent=67 // pred_region
          %s517 = smul.u32 2, %s31
          %p518 = scmp.lt.s32.totalorder %s517, 3
          %s519 = scalar_select %p518, %s517, 3
          %s520 = smul.addr %s519, 4
          %s521 = scalar_lea.vmem %s0, %s520
          %s522 = smul.u32 2, %s31
        $region72: #{tpu_custom_call.1} parent=67 // pred_fallthru
          _
        // Predicated region
        $region73: #{tpu_custom_call.1} parent=67 // pred_check
          %p523 = pneg %p77
        $region74: #{tpu_custom_call.1} parent=67 // pred_check_branch
          %525 = sbr.rel (%p523) target = $region76
        $region75: #{tpu_custom_call.1} parent=67 // pred_region
          %s526 = sand.u32 %s67, 1
          %s527 = scalar_lea.sflag [#allocation4], %s526
          %s528 = sand.u32 %s67, 1
          %s529 = smul.addr %s528, 8
          %s530 = scalar_lea.vmem [#allocation3], %s529
          %s531 = smul.u32 2, %s31
          %s533 = ssub.s32 128, 128
          %534 = vsyncadd %s527, %s533
          %s535 = smul.addr %s531, 64
          %s536 = scalar_lea.hbm %s1, %s535
          %s537 = sshll.u32 %s530, 4
          %s538 = int_to_ptr.vmem [resolvable:$true] %s537
          %543 = dma.hbm_to_vmem [thread:$0]  %s536, 128, %s538, %s527, 64, 64, 4
        $region76: #{tpu_custom_call.1} parent=67 // pred_fallthru
          _
        // Predicated region
        $region77: #{tpu_custom_call.1} parent=67 // pred_check
          %p544 = pneg %p103
        $region78: #{tpu_custom_call.1} parent=67 // pred_check_branch
          %546 = sbr.rel (%p544) target = $region80
        $region79: #{tpu_custom_call.1} parent=67 // pred_region
          %s547 = smul.u32 2, %s31
          %p548 = scmp.lt.s32.totalorder %s547, 3
          %s549 = scalar_select %p548, %s547, 3
          %s550 = smul.addr %s549, 8
          %s551 = scalar_lea.vmem %s2, %s550
          %s552 = smul.u32 2, %s31
        $region80: #{tpu_custom_call.1} parent=67 // pred_fallthru
          _
      $region68: #{tpu_custom_call.1} parent=5 // pred_fallthru
        _
      %p553 = scmp.le.s32.totalorder 1, %s31
      %p554 = scmp.lt.s32.totalorder %s31, 3
      %p555 = pnand %p553, %p554
      %p556 = pneg %p555
      // Predicated region
      $region81: #{tpu_custom_call.1} parent=5 // pred_check
        _
      $region82: #{tpu_custom_call.1} parent=5 // pred_check_branch
        %558 = sbr.rel (%p555) target = $region84
      $region83: #{tpu_custom_call.1} parent=5 // pred_region
        %s559 = ssub.s32 %s31, 1
        %s560 = sand.u32 %s70, 1
        %s561 = scalar_lea.sflag [#allocation4], %s560
        %s562 = sand.u32 %s70, 1
        %s563 = smul.addr %s562, 8
        %s564 = scalar_lea.vmem [#allocation3], %s563
        // Predicated region
        $region85: #{tpu_custom_call.1} parent=83 // pred_check
          %p565 = pneg %p83
        $region86: #{tpu_custom_call.1} parent=83 // pred_check_branch
          %567 = sbr.rel (%p565) target = $region88
        $region87: #{tpu_custom_call.1} parent=83 // pred_region
          %568 = dma.done %s561, 128
        $region88: #{tpu_custom_call.1} parent=83 // pred_fallthru
          _
        // Predicated region
        $region89: #{tpu_custom_call.1} parent=83 // pred_check
          %p569 = pneg %p130
        $region90: #{tpu_custom_call.1} parent=83 // pred_check_branch
          %571 = sbr.rel (%p569) target = $region92
        $region91: #{tpu_custom_call.1} parent=83 // pred_region
          %572 = dma.done [#allocation7], 256
        $region92: #{tpu_custom_call.1} parent=83 // pred_fallthru
          _
        // Predicated region
        $region93: #{tpu_custom_call.1} parent=83 // pred_check
          %p573 = pneg %p151
        $region94: #{tpu_custom_call.1} parent=83 // pred_check_branch
          %575 = sbr.rel (%p573) target = $region96
        $region95: #{tpu_custom_call.1} parent=83 // pred_region
          %576 = dma.done [#allocation7], 256
        $region96: #{tpu_custom_call.1} parent=83 // pred_fallthru
          _
        // Predicated region
        $region97: #{tpu_custom_call.1} parent=83 // pred_check
          %p577 = pneg %p172
        $region98: #{tpu_custom_call.1} parent=83 // pred_check_branch
          %579 = sbr.rel (%p577) target = $region100
        $region99: #{tpu_custom_call.1} parent=83 // pred_region
          %580 = dma.done [#allocation10], 256
        $region100: #{tpu_custom_call.1} parent=83 // pred_fallthru
          _
        // Predicated region
        $region101: #{tpu_custom_call.1} parent=83 // pred_check
          %p581 = pneg %p193
        $region102: #{tpu_custom_call.1} parent=83 // pred_check_branch
          %583 = sbr.rel (%p581) target = $region104
        $region103: #{tpu_custom_call.1} parent=83 // pred_region
          %584 = dma.done [#allocation10], 256
        $region104: #{tpu_custom_call.1} parent=83 // pred_fallthru
          _
        // Predicated region
        $region105: #{tpu_custom_call.1} parent=83 // pred_check
          %p585 = pneg %p256
        $region106: #{tpu_custom_call.1} parent=83 // pred_check_branch
          %587 = sbr.rel (%p585) target = $region108
        $region107: #{tpu_custom_call.1} parent=83 // pred_region
          %588 = dma.done [#allocation13], 16
        $region108: #{tpu_custom_call.1} parent=83 // pred_fallthru
          _
        %s589 = smul.u32 2, %s36
        %p590 = scmp.lt.s32.totalorder %s589, 3
        %s591 = scalar_select %p590, %s589, 3
        %s592 = smul.addr %s591, 4
        %s593 = scalar_lea.vmem %s0, %s592
        %p594 = pneg %p57
        %p595 = pneg %p54
        %s596 = sand.u32 %s70, 1
        %s597 = scalar_lea.sflag [#allocation4], %s596
        %s598 = sand.u32 %s70, 1
        %s599 = smul.addr %s598, 8
        %s600 = scalar_lea.vmem [#allocation3], %s599
        %p601 = pneg %p83
        %p602 = pneg %p80
        %s603 = smul.u32 2, %s36
        %p604 = scmp.lt.s32.totalorder %s603, 3
        %s605 = scalar_select %p604, %s603, 3
        %s606 = smul.addr %s605, 8
        %s607 = scalar_lea.vmem %s2, %s606
        %p608 = pneg %p109
        %p609 = pneg %p106
        %p610 = pneg %p130
        %p611 = pneg %p127
        %p612 = pneg %p151
        %p613 = pneg %p148
        %p614 = pneg %p172
        %p615 = pneg %p169
        %p616 = pneg %p193
        %p617 = pneg %p190
        %p618 = pneg %p214
        %p619 = pneg %p211
        %p620 = pneg %p235
        %p621 = pneg %p232
        %p622 = pneg %p256
        %p623 = pneg %p253
        %p624 = pneg %p277
        %p625 = pneg %p274
        %p626 = pneg %p298
        %p627 = pneg %p295
        %p628 = pneg %p319
        %p629 = pneg %p316
        %p630 = pneg %p340
        %p631 = pneg %p337
        %p632 = pneg %p361
        %p633 = pneg %p358
        %p634 = pneg %p382
        %p635 = pneg %p379
        %p636 = pneg %p408
        %p637 = pneg %p405
        %s638 = sand.u32 %s395, 1
        %s639 = scalar_lea.sflag [#allocation5], %s638
        %s640 = sand.u32 %s395, 1
        %s641 = smul.addr %s640, 16
        %s642 = scalar_lea.vmem [#allocation14], %s641
        %s643 = smul.u32 2, %s36
        %p644 = scmp.lt.s32.totalorder %s643, 3
        %s645 = scalar_select %p644, %s643, 3
        %s646 = smul.addr %s645, 4
        %s647 = scalar_lea.vmem %s0, %s646
        %s648 = smul.u32 2, %s36
        %s649 = smul.u32 2, %s36
        %s650 = smul.u32 2, %s36
        %p651 = scmp.lt.s32.totalorder %s650, 3
        %s652 = scalar_select %p651, %s650, 3
        %s653 = smul.addr %s652, 8
        %s654 = scalar_lea.vmem %s2, %s653
        %s655 = smul.u32 2, %s36
        %s656 = smul.u32 2, %s36
        %v658 = vld [vmem:[%s654] sm:$0xff]
        %v659 = vld [vmem:[%s654 + $0x8] sm:$0xff]
        %v660 = vld [vmem:[%s647] sm:$0xf]
        %v661 = vld [vmem:[%s647 + $0x4] sm:$0xf]
        %v662 = vld [vmem:[%s564] sm:$0xf]
        %v663 = vld [vmem:[%s564 + $0x4] sm:$0xf]
        %v664 = vpack.c.bf16 %v659, %v658
        %v665 = vld [vmem:[#allocation6] sm:$0xf]
        %v666 = vld [vmem:[#allocation6 + $0x4] sm:$0xf]
        %v667 = vld [vmem:[#allocation6 + $0x8] sm:$0xf]
        %v668 = vld [vmem:[#allocation6 + $0xc] sm:$0xf]
        %v671 = vunpack.c.l.b16 %v660
        %v672 = vunpack.c.l.b16 %v661
        %v673 = vpack.c.b16 %v672, %v671
        %v678 = vunpack.c.l.b16 %v665
        %v679 = vunpack.c.l.b16 %v666
        %v680 = vunpack.c.l.b16 %v667
        %v681 = vunpack.c.l.b16 %v668
        %v682 = vpack.c.b16 %v679, %v678
        %v683 = vpack.c.b16 %v681, %v680
        %vm686 = vcmask 261120
        %v688 = vsel %vm686, %v673, 0
        %690 = vmatprep.subr.bf16.mxu0 0
        %691 = vmatpush1.bf16.msra.mxu0 %v682
        %692 = vmatprep.subr.bf16.mxu0 0
        %693 = vmatpush1.bf16.msra.mxu0 %v683
        %694 = vmatprep.subr.bf16.mxu0 0
        %695 = vmatpush1.bf16.msra.mxu0 0
        %696 = vmatprep.subr.bf16.mxu0 0
        %697 = vmatpush1.bf16.msra.mxu0 0
        %698 = vmatprep.subr.bf16.mxu0 0
        %699 = vmatpush1.bf16.msra.mxu0 0
        %700 = vmatprep.subr.bf16.mxu0 0
        %701 = vmatpush1.bf16.msra.mxu0 0
        %702 = vmatprep.subr.bf16.mxu0 0
        %703 = vmatpush1.bf16.msra.mxu0 0
        %704 = vmatprep.subr.bf16.mxu0 0
        %705 = vmatpush1.bf16.msra.mxu0 0
        %706 = vmatprep.subr.bf16.mxu0 0
        %707 = vmatpush1.bf16.msra.mxu0 0
        %708 = vmatprep.subr.bf16.mxu0 0
        %709 = vmatpush1.bf16.msra.mxu0 0
        %710 = vmatprep.subr.bf16.mxu0 0
        %711 = vmatpush1.bf16.msra.mxu0 0
        %712 = vmatprep.subr.bf16.mxu0 0
        %713 = vmatpush1.bf16.msra.mxu0 0
        %714 = vmatprep.subr.bf16.mxu0 0
        %715 = vmatpush1.bf16.msra.mxu0 0
        %716 = vmatprep.subr.bf16.mxu0 0
        %717 = vmatpush1.bf16.msra.mxu0 0
        %718 = vmatprep.subr.bf16.mxu0 0
        %719 = vmatpush1.bf16.msra.mxu0 0
        %720 = vmatprep.subr.bf16.mxu0 0
        %721 = vmatpush1.bf16.msra.mxu0 0
        %722 = vmatprep.mubr.bf16.mxu0 0
        %723 = vmatmul.mubr.bf16.gmra.mrb[0].mxu0 %v688
        %v724 = vpop.f32.mrb[0].mxu0
        %v725 = vadd.f32 0.0, %v724
        %v726 = vpop.f32.mrb[0].mxu0
        %v727 = vpop.f32.mrb[0].mxu0
        %v728 = vadd.f32 0.0, %v727
        %v729 = vpop.f32.mrb[0].mxu0
        %730 = vdwg.mxu0
        %v731 = vpack.c.bf16 %v728, %v725
        %v732 = vld [vmem:[#allocation8] sm:$0xf]
        %v733 = vld [vmem:[#allocation8 + $0x4] sm:$0xf]
        %v734 = vld [vmem:[#allocation8 + $0x8] sm:$0xf]
        %v735 = vld [vmem:[#allocation8 + $0xc] sm:$0xf]
        %v738 = vunpack.c.l.b16 %v662
        %v739 = vunpack.c.l.b16 %v663
        %v740 = vpack.c.b16 %v739, %v738
        %v745 = vunpack.c.l.b16 %v732
        %v746 = vunpack.c.l.b16 %v733
        %v747 = vunpack.c.l.b16 %v734
        %v748 = vunpack.c.l.b16 %v735
        %v749 = vpack.c.b16 %v746, %v745
        %v750 = vpack.c.b16 %v748, %v747
        %v754 = vsel %vm686, %v740, 0
        %756 = vmatprep.subr.bf16.mxu0 0
        %757 = vmatpush1.bf16.msra.mxu0 %v749
        %758 = vmatprep.subr.bf16.mxu0 0
        %759 = vmatpush1.bf16.msra.mxu0 %v750
        %760 = vmatprep.subr.bf16.mxu0 0
        %761 = vmatpush1.bf16.msra.mxu0 0
        %762 = vmatprep.subr.bf16.mxu0 0
        %763 = vmatpush1.bf16.msra.mxu0 0
        %764 = vmatprep.subr.bf16.mxu0 0
        %765 = vmatpush1.bf16.msra.mxu0 0
        %766 = vmatprep.subr.bf16.mxu0 0
        %767 = vmatpush1.bf16.msra.mxu0 0
        %768 = vmatprep.subr.bf16.mxu0 0
        %769 = vmatpush1.bf16.msra.mxu0 0
        %770 = vmatprep.subr.bf16.mxu0 0
        %771 = vmatpush1.bf16.msra.mxu0 0
        %772 = vmatprep.subr.bf16.mxu0 0
        %773 = vmatpush1.bf16.msra.mxu0 0
        %774 = vmatprep.subr.bf16.mxu0 0
        %775 = vmatpush1.bf16.msra.mxu0 0
        %776 = vmatprep.subr.bf16.mxu0 0
        %777 = vmatpush1.bf16.msra.mxu0 0
        %778 = vmatprep.subr.bf16.mxu0 0
        %779 = vmatpush1.bf16.msra.mxu0 0
        %780 = vmatprep.subr.bf16.mxu0 0
        %781 = vmatpush1.bf16.msra.mxu0 0
        %782 = vmatprep.subr.bf16.mxu0 0
        %783 = vmatpush1.bf16.msra.mxu0 0
        %784 = vmatprep.subr.bf16.mxu0 0
        %785 = vmatpush1.bf16.msra.mxu0 0
        %786 = vmatprep.subr.bf16.mxu0 0
        %787 = vmatpush1.bf16.msra.mxu0 0
        %788 = vmatprep.mubr.bf16.mxu0 0
        %789 = vmatmul.mubr.bf16.gmra.mrb[0].mxu0 %v754
        %v790 = vpop.f32.mrb[0].mxu0
        %v791 = vadd.f32 0.0, %v790
        %v792 = vpop.f32.mrb[0].mxu0
        %v793 = vpop.f32.mrb[0].mxu0
        %v794 = vadd.f32 0.0, %v793
        %v795 = vpop.f32.mrb[0].mxu0
        %796 = vdwg.mxu0
        %v797 = vpack.c.bf16 %v794, %v791
        %v798 = vld [vmem:[#allocation9] sm:$0xf]
        %v799 = vld [vmem:[#allocation9 + $0x4] sm:$0xf]
        %v800 = vld [vmem:[#allocation9 + $0x8] sm:$0xf]
        %v801 = vld [vmem:[#allocation9 + $0xc] sm:$0xf]
        %v806 = vunpack.c.l.b16 %v798
        %v807 = vunpack.c.l.b16 %v799
        %v808 = vunpack.c.l.b16 %v800
        %v809 = vunpack.c.l.b16 %v801
        %v810 = vpack.c.b16 %v807, %v806
        %v811 = vpack.c.b16 %v809, %v808
        %v815 = vsel %vm686, %v664, 0
        %817 = vmatprep.subr.bf16.mxu0 0
        %818 = vmatpush1.bf16.msra.mxu0 %v810
        %819 = vmatprep.subr.bf16.mxu0 0
        %820 = vmatpush1.bf16.msra.mxu0 %v811
        %821 = vmatprep.subr.bf16.mxu0 0
        %822 = vmatpush1.bf16.msra.mxu0 0
        %823 = vmatprep.subr.bf16.mxu0 0
        %824 = vmatpush1.bf16.msra.mxu0 0
        %825 = vmatprep.subr.bf16.mxu0 0
        %826 = vmatpush1.bf16.msra.mxu0 0
        %827 = vmatprep.subr.bf16.mxu0 0
        %828 = vmatpush1.bf16.msra.mxu0 0
        %829 = vmatprep.subr.bf16.mxu0 0
        %830 = vmatpush1.bf16.msra.mxu0 0
        %831 = vmatprep.subr.bf16.mxu0 0
        %832 = vmatpush1.bf16.msra.mxu0 0
        %833 = vmatprep.subr.bf16.mxu0 0
        %834 = vmatpush1.bf16.msra.mxu0 0
        %835 = vmatprep.subr.bf16.mxu0 0
        %836 = vmatpush1.bf16.msra.mxu0 0
        %837 = vmatprep.subr.bf16.mxu0 0
        %838 = vmatpush1.bf16.msra.mxu0 0
        %839 = vmatprep.subr.bf16.mxu0 0
        %840 = vmatpush1.bf16.msra.mxu0 0
        %841 = vmatprep.subr.bf16.mxu0 0
        %842 = vmatpush1.bf16.msra.mxu0 0
        %843 = vmatprep.subr.bf16.mxu0 0
        %844 = vmatpush1.bf16.msra.mxu0 0
        %845 = vmatprep.subr.bf16.mxu0 0
        %846 = vmatpush1.bf16.msra.mxu0 0
        %847 = vmatprep.subr.bf16.mxu0 0
        %848 = vmatpush1.bf16.msra.mxu0 0
        %849 = vmatprep.mubr.bf16.mxu0 0
        %850 = vmatmul.mubr.bf16.gmra.mrb[0].mxu0 %v815
        %v851 = vpop.f32.mrb[0].mxu0
        %v852 = vadd.f32 0.0, %v851
        %v853 = vpop.f32.mrb[0].mxu0
        %v854 = vpop.f32.mrb[0].mxu0
        %v855 = vadd.f32 0.0, %v854
        %v856 = vpop.f32.mrb[0].mxu0
        %857 = vdwg.mxu0
        %v858 = vpack.c.bf16 %v855, %v852
        %v860 = vunpack.c.l.b16 %v858
        %v861 = vunpack.c.h.b16 %v858
        %v862 = vpack.c.b16 %v860, %v860
        %v863 = vpack.c.b16 %v861, %v861
        %v865 = vunpack.c.l.b16 %v797
        %v866 = vunpack.c.h.b16 %v797
        %v867 = vpack.c.b16 %v865, %v865
        %v868 = vpack.c.b16 %v866, %v866
        %v870 = vunpack.c.l.b16 %v731
        %v871 = vunpack.c.h.b16 %v731
        %v872 = vpack.c.b16 %v870, %v870
        %v873 = vpack.c.b16 %v871, %v871
        %vm874 = vcmask 64512
        %v876 = vsel %vm874, %v862, 0
        %v879 = vsel %vm874, %v867, 0
        %881 = vmatprep.subr.bf16.mxu0 0
        %882 = vmatpush1.bf16.xpose.msra.mxu0 %v879
        %883 = vmatprep.subr.bf16.mxu0 0
        %884 = vmatpush1.bf16.xpose.msra.mxu0 0
        %885 = vmatprep.subr.bf16.mxu0 0
        %886 = vmatpush1.bf16.xpose.msra.mxu0 0
        %887 = vmatprep.subr.bf16.mxu0 0
        %888 = vmatpush1.bf16.xpose.msra.mxu0 0
        %889 = vmatprep.subr.bf16.mxu0 0
        %890 = vmatpush1.bf16.xpose.msra.mxu0 0
        %891 = vmatprep.subr.bf16.mxu0 0
        %892 = vmatpush1.bf16.xpose.msra.mxu0 0
        %893 = vmatprep.subr.bf16.mxu0 0
        %894 = vmatpush1.bf16.xpose.msra.mxu0 0
        %895 = vmatprep.subr.bf16.mxu0 0
        %896 = vmatpush1.bf16.xpose.msra.mxu0 0
        %897 = vmatprep.subr.bf16.mxu0 0
        %898 = vmatpush1.bf16.xpose.msra.mxu0 0
        %899 = vmatprep.subr.bf16.mxu0 0
        %900 = vmatpush1.bf16.xpose.msra.mxu0 0
        %901 = vmatprep.subr.bf16.mxu0 0
        %902 = vmatpush1.bf16.xpose.msra.mxu0 0
        %903 = vmatprep.subr.bf16.mxu0 0
        %904 = vmatpush1.bf16.xpose.msra.mxu0 0
        %905 = vmatprep.subr.bf16.mxu0 0
        %906 = vmatpush1.bf16.xpose.msra.mxu0 0
        %907 = vmatprep.subr.bf16.mxu0 0
        %908 = vmatpush1.bf16.xpose.msra.mxu0 0
        %909 = vmatprep.subr.bf16.mxu0 0
        %910 = vmatpush1.bf16.xpose.msra.mxu0 0
        %911 = vmatprep.subr.bf16.mxu0 0
        %912 = vmatpush1.bf16.xpose.msra.mxu0 0
        %913 = vmatprep.mubr.bf16.mxu0 0
        %914 = vmatmul.mubr.bf16.gmra.mrb[0].mxu0 %v876
        %v915 = vpop.f32.mrb[0].mxu0
        %v916 = vadd.f32 0.0, %v915
        %v917 = vpop.f32.mrb[0].mxu0
        %v918 = vpop.f32.mrb[0].mxu0
        %v919 = vpop.f32.mrb[0].mxu0
        %920 = vdwg.mxu0
        %v922 = vsel %vm874, %v863, 0
        %v925 = vsel %vm874, %v868, 0
        %927 = vmatprep.subr.bf16.mxu0 0
        %928 = vmatpush1.bf16.xpose.msra.mxu0 %v925
        %929 = vmatprep.subr.bf16.mxu0 0
        %930 = vmatpush1.bf16.xpose.msra.mxu0 0
        %931 = vmatprep.subr.bf16.mxu0 0
        %932 = vmatpush1.bf16.xpose.msra.mxu0 0
        %933 = vmatprep.subr.bf16.mxu0 0
        %934 = vmatpush1.bf16.xpose.msra.mxu0 0
        %935 = vmatprep.subr.bf16.mxu0 0
        %936 = vmatpush1.bf16.xpose.msra.mxu0 0
        %937 = vmatprep.subr.bf16.mxu0 0
        %938 = vmatpush1.bf16.xpose.msra.mxu0 0
        %939 = vmatprep.subr.bf16.mxu0 0
        %940 = vmatpush1.bf16.xpose.msra.mxu0 0
        %941 = vmatprep.subr.bf16.mxu0 0
        %942 = vmatpush1.bf16.xpose.msra.mxu0 0
        %943 = vmatprep.subr.bf16.mxu0 0
        %944 = vmatpush1.bf16.xpose.msra.mxu0 0
        %945 = vmatprep.subr.bf16.mxu0 0
        %946 = vmatpush1.bf16.xpose.msra.mxu0 0
        %947 = vmatprep.subr.bf16.mxu0 0
        %948 = vmatpush1.bf16.xpose.msra.mxu0 0
        %949 = vmatprep.subr.bf16.mxu0 0
        %950 = vmatpush1.bf16.xpose.msra.mxu0 0
        %951 = vmatprep.subr.bf16.mxu0 0
        %952 = vmatpush1.bf16.xpose.msra.mxu0 0
        %953 = vmatprep.subr.bf16.mxu0 0
        %954 = vmatpush1.bf16.xpose.msra.mxu0 0
        %955 = vmatprep.subr.bf16.mxu0 0
        %956 = vmatpush1.bf16.xpose.msra.mxu0 0
        %957 = vmatprep.subr.bf16.mxu0 0
        %958 = vmatpush1.bf16.xpose.msra.mxu0 0
        %959 = vmatprep.mubr.bf16.mxu0 0
        %960 = vmatmul.mubr.bf16.gmra.mrb[0].mxu0 %v922
        %v961 = vpop.f32.mrb[0].mxu0
        %v962 = vadd.f32 0.0, %v961
        %v963 = vpop.f32.mrb[0].mxu0
        %v964 = vpop.f32.mrb[0].mxu0
        %v965 = vpop.f32.mrb[0].mxu0
        %966 = vdwg.mxu0
        %v967 = vsel %vm874, %v916, -inf
        %968 = vmax.xlane.f32.xlu0 %v967
        %v969 = vpop.xlane.xlu0 %968
        %v970 = vsel %vm874, %v962, -inf
        %971 = vmax.xlane.f32.xlu0 %v970
        %v972 = vpop.xlane.xlu0 %971
        %v973 = vsub.f32 %v916, %v969
        %v974 = vsub.f32 %v962, %v972
        %v975 = vmul.f32 %v973, 1.442695
        %v976 = vpow.pop %v975
        %v977 = vmul.f32 %v974, 1.442695
        %v978 = vpow.pop %v977
        %v979 = vsel %vm874, %v976, 0.0
        %980 = vadd.xlane.f32.xlu0 %v979
        %v981 = vpop.xlane.xlu0 %980
        %v982 = vsel %vm874, %v978, 0.0
        %983 = vadd.xlane.f32.xlu0 %v982
        %v984 = vpop.xlane.xlu0 %983
        %v985 = vrcp.pop %v981
        %v986 = vrcp.pop %v984
        %v987 = vmul.f32 %v976, %v985
        %v988 = vmul.f32 %v978, %v986
        %v989 = vpack.c.bf16 %v987, %v987
        %v990 = vpack.c.bf16 %v988, %v988
        %v992 = vsel %vm874, %v989, 0
        %vm994 = vcmask 1043456
        %v996 = vsel %vm994, %v872, 0
        %998 = vmatprep.subr.bf16.mxu0 0
        %999 = vmatpush1.bf16.msra.mxu0 %v996
        %1000 = vmatprep.subr.bf16.mxu0 0
        %1001 = vmatpush1.bf16.msra.mxu0 0
        %1002 = vmatprep.subr.bf16.mxu0 0
        %1003 = vmatpush1.bf16.msra.mxu0 0
        %1004 = vmatprep.subr.bf16.mxu0 0
        %1005 = vmatpush1.bf16.msra.mxu0 0
        %1006 = vmatprep.subr.bf16.mxu0 0
        %1007 = vmatpush1.bf16.msra.mxu0 0
        %1008 = vmatprep.subr.bf16.mxu0 0
        %1009 = vmatpush1.bf16.msra.mxu0 0
        %1010 = vmatprep.subr.bf16.mxu0 0
        %1011 = vmatpush1.bf16.msra.mxu0 0
        %1012 = vmatprep.subr.bf16.mxu0 0
        %1013 = vmatpush1.bf16.msra.mxu0 0
        %1014 = vmatprep.subr.bf16.mxu0 0
        %1015 = vmatpush1.bf16.msra.mxu0 0
        %1016 = vmatprep.subr.bf16.mxu0 0
        %1017 = vmatpush1.bf16.msra.mxu0 0
        %1018 = vmatprep.subr.bf16.mxu0 0
        %1019 = vmatpush1.bf16.msra.mxu0 0
        %1020 = vmatprep.subr.bf16.mxu0 0
        %1021 = vmatpush1.bf16.msra.mxu0 0
        %1022 = vmatprep.subr.bf16.mxu0 0
        %1023 = vmatpush1.bf16.msra.mxu0 0
        %1024 = vmatprep.subr.bf16.mxu0 0
        %1025 = vmatpush1.bf16.msra.mxu0 0
        %1026 = vmatprep.subr.bf16.mxu0 0
        %1027 = vmatpush1.bf16.msra.mxu0 0
        %1028 = vmatprep.subr.bf16.mxu0 0
        %1029 = vmatpush1.bf16.msra.mxu0 0
        %1030 = vmatprep.mubr.bf16.mxu0 0
        %1031 = vmatmul.mubr.bf16.gmra.mrb[0].mxu0 %v992
        %v1032 = vpop.f32.mrb[0].mxu0
        %v1033 = vadd.f32 0.0, %v1032
        %v1034 = vpop.f32.mrb[0].mxu0
        %v1035 = vpop.f32.mrb[0].mxu0
        %v1036 = vpop.f32.mrb[0].mxu0
        %1037 = vdwg.mxu0
        %v1039 = vsel %vm874, %v990, 0
        %v1042 = vsel %vm994, %v873, 0
        %1044 = vmatprep.subr.bf16.mxu0 0
        %1045 = vmatpush1.bf16.msra.mxu0 %v1042
        %1046 = vmatprep.subr.bf16.mxu0 0
        %1047 = vmatpush1.bf16.msra.mxu0 0
        %1048 = vmatprep.subr.bf16.mxu0 0
        %1049 = vmatpush1.bf16.msra.mxu0 0
        %1050 = vmatprep.subr.bf16.mxu0 0
        %1051 = vmatpush1.bf16.msra.mxu0 0
        %1052 = vmatprep.subr.bf16.mxu0 0
        %1053 = vmatpush1.bf16.msra.mxu0 0
        %1054 = vmatprep.subr.bf16.mxu0 0
        %1055 = vmatpush1.bf16.msra.mxu0 0
        %1056 = vmatprep.subr.bf16.mxu0 0
        %1057 = vmatpush1.bf16.msra.mxu0 0
        %1058 = vmatprep.subr.bf16.mxu0 0
        %1059 = vmatpush1.bf16.msra.mxu0 0
        %1060 = vmatprep.subr.bf16.mxu0 0
        %1061 = vmatpush1.bf16.msra.mxu0 0
        %1062 = vmatprep.subr.bf16.mxu0 0
        %1063 = vmatpush1.bf16.msra.mxu0 0
        %1064 = vmatprep.subr.bf16.mxu0 0
        %1065 = vmatpush1.bf16.msra.mxu0 0
        %1066 = vmatprep.subr.bf16.mxu0 0
        %1067 = vmatpush1.bf16.msra.mxu0 0
        %1068 = vmatprep.subr.bf16.mxu0 0
        %1069 = vmatpush1.bf16.msra.mxu0 0
        %1070 = vmatprep.subr.bf16.mxu0 0
        %1071 = vmatpush1.bf16.msra.mxu0 0
        %1072 = vmatprep.subr.bf16.mxu0 0
        %1073 = vmatpush1.bf16.msra.mxu0 0
        %1074 = vmatprep.subr.bf16.mxu0 0
        %1075 = vmatpush1.bf16.msra.mxu0 0
        %1076 = vmatprep.mubr.bf16.mxu0 0
        %1077 = vmatmul.mubr.bf16.gmra.mrb[0].mxu0 %v1039
        %v1078 = vpop.f32.mrb[0].mxu0
        %v1079 = vadd.f32 0.0, %v1078
        %v1080 = vpop.f32.mrb[0].mxu0
        %v1081 = vpop.f32.mrb[0].mxu0
        %v1082 = vpop.f32.mrb[0].mxu0
        %1083 = vdwg.mxu0
        %1084 = vst.msk [vmem:[#allocation2] sm:$0xff] %vm874, %v1033
        %1085 = vst.msk [vmem:[#allocation2 + $0x8] sm:$0xff] %vm874, %v1079
        %1086 = vrot.lane.b32.xlu0 %v862, 120
        %v1087 = vpop.permute.xlu0 %1086
        %1088 = vrot.lane.b32.xlu0 %v867, 120
        %v1089 = vpop.permute.xlu0 %1088
        %v1091 = vsel %vm874, %v1087, 0
        %v1094 = vsel %vm874, %v1089, 0
        %1096 = vmatprep.subr.bf16.mxu0 0
        %1097 = vmatpush1.bf16.xpose.msra.mxu0 %v1094
        %1098 = vmatprep.subr.bf16.mxu0 0
        %1099 = vmatpush1.bf16.xpose.msra.mxu0 0
        %1100 = vmatprep.subr.bf16.mxu0 0
        %1101 = vmatpush1.bf16.xpose.msra.mxu0 0
        %1102 = vmatprep.subr.bf16.mxu0 0
        %1103 = vmatpush1.bf16.xpose.msra.mxu0 0
        %1104 = vmatprep.subr.bf16.mxu0 0
        %1105 = vmatpush1.bf16.xpose.msra.mxu0 0
        %1106 = vmatprep.subr.bf16.mxu0 0
        %1107 = vmatpush1.bf16.xpose.msra.mxu0 0
        %1108 = vmatprep.subr.bf16.mxu0 0
        %1109 = vmatpush1.bf16.xpose.msra.mxu0 0
        %1110 = vmatprep.subr.bf16.mxu0 0
        %1111 = vmatpush1.bf16.xpose.msra.mxu0 0
        %1112 = vmatprep.subr.bf16.mxu0 0
        %1113 = vmatpush1.bf16.xpose.msra.mxu0 0
        %1114 = vmatprep.subr.bf16.mxu0 0
        %1115 = vmatpush1.bf16.xpose.msra.mxu0 0
        %1116 = vmatprep.subr.bf16.mxu0 0
        %1117 = vmatpush1.bf16.xpose.msra.mxu0 0
        %1118 = vmatprep.subr.bf16.mxu0 0
        %1119 = vmatpush1.bf16.xpose.msra.mxu0 0
        %1120 = vmatprep.subr.bf16.mxu0 0
        %1121 = vmatpush1.bf16.xpose.msra.mxu0 0
        %1122 = vmatprep.subr.bf16.mxu0 0
        %1123 = vmatpush1.bf16.xpose.msra.mxu0 0
        %1124 = vmatprep.subr.bf16.mxu0 0
        %1125 = vmatpush1.bf16.xpose.msra.mxu0 0
        %1126 = vmatprep.subr.bf16.mxu0 0
        %1127 = vmatpush1.bf16.xpose.msra.mxu0 0
        %1128 = vmatprep.mubr.bf16.mxu0 0
        %1129 = vmatmul.mubr.bf16.gmra.mrb[0].mxu0 %v1091
        %v1130 = vpop.f32.mrb[0].mxu0
        %v1131 = vadd.f32 0.0, %v1130
        %v1132 = vpop.f32.mrb[0].mxu0
        %v1133 = vpop.f32.mrb[0].mxu0
        %v1134 = vpop.f32.mrb[0].mxu0
        %1135 = vdwg.mxu0
        %1136 = vrot.lane.b32.xlu0 %v863, 120
        %v1137 = vpop.permute.xlu0 %1136
        %1138 = vrot.lane.b32.xlu0 %v868, 120
        %v1139 = vpop.permute.xlu0 %1138
        %v1141 = vsel %vm874, %v1137, 0
        %v1144 = vsel %vm874, %v1139, 0
        %1146 = vmatprep.subr.bf16.mxu0 0
        %1147 = vmatpush1.bf16.xpose.msra.mxu0 %v1144
        %1148 = vmatprep.subr.bf16.mxu0 0
        %1149 = vmatpush1.bf16.xpose.msra.mxu0 0
        %1150 = vmatprep.subr.bf16.mxu0 0
        %1151 = vmatpush1.bf16.xpose.msra.mxu0 0
        %1152 = vmatprep.subr.bf16.mxu0 0
        %1153 = vmatpush1.bf16.xpose.msra.mxu0 0
        %1154 = vmatprep.subr.bf16.mxu0 0
        %1155 = vmatpush1.bf16.xpose.msra.mxu0 0
        %1156 = vmatprep.subr.bf16.mxu0 0
        %1157 = vmatpush1.bf16.xpose.msra.mxu0 0
        %1158 = vmatprep.subr.bf16.mxu0 0
        %1159 = vmatpush1.bf16.xpose.msra.mxu0 0
        %1160 = vmatprep.subr.bf16.mxu0 0
        %1161 = vmatpush1.bf16.xpose.msra.mxu0 0
        %1162 = vmatprep.subr.bf16.mxu0 0
        %1163 = vmatpush1.bf16.xpose.msra.mxu0 0
        %1164 = vmatprep.subr.bf16.mxu0 0
        %1165 = vmatpush1.bf16.xpose.msra.mxu0 0
        %1166 = vmatprep.subr.bf16.mxu0 0
        %1167 = vmatpush1.bf16.xpose.msra.mxu0 0
        %1168 = vmatprep.subr.bf16.mxu0 0
        %1169 = vmatpush1.bf16.xpose.msra.mxu0 0
        %1170 = vmatprep.subr.bf16.mxu0 0
        %1171 = vmatpush1.bf16.xpose.msra.mxu0 0
        %1172 = vmatprep.subr.bf16.mxu0 0
        %1173 = vmatpush1.bf16.xpose.msra.mxu0 0
        %1174 = vmatprep.subr.bf16.mxu0 0
        %1175 = vmatpush1.bf16.xpose.msra.mxu0 0
        %1176 = vmatprep.subr.bf16.mxu0 0
        %1177 = vmatpush1.bf16.xpose.msra.mxu0 0
        %1178 = vmatprep.mubr.bf16.mxu0 0
        %1179 = vmatmul.mubr.bf16.gmra.mrb[0].mxu0 %v1141
        %v1180 = vpop.f32.mrb[0].mxu0
        %v1181 = vadd.f32 0.0, %v1180
        %v1182 = vpop.f32.mrb[0].mxu0
        %v1183 = vpop.f32.mrb[0].mxu0
        %v1184 = vpop.f32.mrb[0].mxu0
        %1185 = vdwg.mxu0
        %v1186 = vsel %vm874, %v1131, -inf
        %1187 = vmax.xlane.f32.xlu0 %v1186
        %v1188 = vpop.xlane.xlu0 %1187
        %v1189 = vsel %vm874, %v1181, -inf
        %1190 = vmax.xlane.f32.xlu0 %v1189
        %v1191 = vpop.xlane.xlu0 %1190
        %v1192 = vsub.f32 %v1131, %v1188
        %v1193 = vsub.f32 %v1181, %v1191
        %v1194 = vmul.f32 %v1192, 1.442695
        %v1195 = vpow.pop %v1194
        %v1196 = vmul.f32 %v1193, 1.442695
        %v1197 = vpow.pop %v1196
        %v1198 = vsel %vm874, %v1195, 0.0
        %1199 = vadd.xlane.f32.xlu0 %v1198
        %v1200 = vpop.xlane.xlu0 %1199
        %v1201 = vsel %vm874, %v1197, 0.0
        %1202 = vadd.xlane.f32.xlu0 %v1201
        %v1203 = vpop.xlane.xlu0 %1202
        %v1204 = vrcp.pop %v1200
        %v1205 = vrcp.pop %v1203
        %v1206 = vmul.f32 %v1195, %v1204
        %v1207 = vmul.f32 %v1197, %v1205
        %v1208 = vpack.c.bf16 %v1206, %v1206
        %v1209 = vpack.c.bf16 %v1207, %v1207
        %1210 = vrot.lane.b32.xlu0 %v872, 120
        %v1211 = vpop.permute.xlu0 %1210
        %v1213 = vsel %vm874, %v1208, 0
        %v1216 = vsel %vm994, %v1211, 0
        %1218 = vmatprep.subr.bf16.mxu0 0
        %1219 = vmatpush1.bf16.msra.mxu0 %v1216
        %1220 = vmatprep.subr.bf16.mxu0 0
        %1221 = vmatpush1.bf16.msra.mxu0 0
        %1222 = vmatprep.subr.bf16.mxu0 0
        %1223 = vmatpush1.bf16.msra.mxu0 0
        %1224 = vmatprep.subr.bf16.mxu0 0
        %1225 = vmatpush1.bf16.msra.mxu0 0
        %1226 = vmatprep.subr.bf16.mxu0 0
        %1227 = vmatpush1.bf16.msra.mxu0 0
        %1228 = vmatprep.subr.bf16.mxu0 0
        %1229 = vmatpush1.bf16.msra.mxu0 0
        %1230 = vmatprep.subr.bf16.mxu0 0
        %1231 = vmatpush1.bf16.msra.mxu0 0
        %1232 = vmatprep.subr.bf16.mxu0 0
        %1233 = vmatpush1.bf16.msra.mxu0 0
        %1234 = vmatprep.subr.bf16.mxu0 0
        %1235 = vmatpush1.bf16.msra.mxu0 0
        %1236 = vmatprep.subr.bf16.mxu0 0
        %1237 = vmatpush1.bf16.msra.mxu0 0
        %1238 = vmatprep.subr.bf16.mxu0 0
        %1239 = vmatpush1.bf16.msra.mxu0 0
        %1240 = vmatprep.subr.bf16.mxu0 0
        %1241 = vmatpush1.bf16.msra.mxu0 0
        %1242 = vmatprep.subr.bf16.mxu0 0
        %1243 = vmatpush1.bf16.msra.mxu0 0
        %1244 = vmatprep.subr.bf16.mxu0 0
        %1245 = vmatpush1.bf16.msra.mxu0 0
        %1246 = vmatprep.subr.bf16.mxu0 0
        %1247 = vmatpush1.bf16.msra.mxu0 0
        %1248 = vmatprep.subr.bf16.mxu0 0
        %1249 = vmatpush1.bf16.msra.mxu0 0
        %1250 = vmatprep.mubr.bf16.mxu0 0
        %1251 = vmatmul.mubr.bf16.gmra.mrb[0].mxu0 %v1213
        %v1252 = vpop.f32.mrb[0].mxu0
        %v1253 = vadd.f32 0.0, %v1252
        %v1254 = vpop.f32.mrb[0].mxu0
        %v1255 = vpop.f32.mrb[0].mxu0
        %v1256 = vpop.f32.mrb[0].mxu0
        %1257 = vdwg.mxu0
        %1258 = vrot.lane.b32.xlu0 %v873, 120
        %v1259 = vpop.permute.xlu0 %1258
        %v1261 = vsel %vm874, %v1209, 0
        %v1264 = vsel %vm994, %v1259, 0
        %1266 = vmatprep.subr.bf16.mxu0 0
        %1267 = vmatpush1.bf16.msra.mxu0 %v1264
        %1268 = vmatprep.subr.bf16.mxu0 0
        %1269 = vmatpush1.bf16.msra.mxu0 0
        %1270 = vmatprep.subr.bf16.mxu0 0
        %1271 = vmatpush1.bf16.msra.mxu0 0
        %1272 = vmatprep.subr.bf16.mxu0 0
        %1273 = vmatpush1.bf16.msra.mxu0 0
        %1274 = vmatprep.subr.bf16.mxu0 0
        %1275 = vmatpush1.bf16.msra.mxu0 0
        %1276 = vmatprep.subr.bf16.mxu0 0
        %1277 = vmatpush1.bf16.msra.mxu0 0
        %1278 = vmatprep.subr.bf16.mxu0 0
        %1279 = vmatpush1.bf16.msra.mxu0 0
        %1280 = vmatprep.subr.bf16.mxu0 0
        %1281 = vmatpush1.bf16.msra.mxu0 0
        %1282 = vmatprep.subr.bf16.mxu0 0
        %1283 = vmatpush1.bf16.msra.mxu0 0
        %1284 = vmatprep.subr.bf16.mxu0 0
        %1285 = vmatpush1.bf16.msra.mxu0 0
        %1286 = vmatprep.subr.bf16.mxu0 0
        %1287 = vmatpush1.bf16.msra.mxu0 0
        %1288 = vmatprep.subr.bf16.mxu0 0
        %1289 = vmatpush1.bf16.msra.mxu0 0
        %1290 = vmatprep.subr.bf16.mxu0 0
        %1291 = vmatpush1.bf16.msra.mxu0 0
        %1292 = vmatprep.subr.bf16.mxu0 0
        %1293 = vmatpush1.bf16.msra.mxu0 0
        %1294 = vmatprep.subr.bf16.mxu0 0
        %1295 = vmatpush1.bf16.msra.mxu0 0
        %1296 = vmatprep.subr.bf16.mxu0 0
        %1297 = vmatpush1.bf16.msra.mxu0 0
        %1298 = vmatprep.mubr.bf16.mxu0 0
        %1299 = vmatmul.mubr.bf16.gmra.mrb[0].mxu0 %v1261
        %v1300 = vpop.f32.mrb[0].mxu0
        %v1301 = vadd.f32 0.0, %v1300
        %v1302 = vpop.f32.mrb[0].mxu0
        %v1303 = vpop.f32.mrb[0].mxu0
        %v1304 = vpop.f32.mrb[0].mxu0
        %1305 = vdwg.mxu0
        %1308 = vrot.lane.b32.xlu0 %v1253, 8
        %v1309 = vpop.permute.xlu0 %1308
        %1310 = vrot.lane.b32.xlu0 %v1301, 8
        %v1311 = vpop.permute.xlu0 %1310
        %vm1314 = vcmask 130112
        %1315 = vst.msk [vmem:[#allocation2] sm:$0xff] %vm1314, %v1309
        %1316 = vst.msk [vmem:[#allocation2 + $0x8] sm:$0xff] %vm1314, %v1311
        %1317 = vrot.lane.b32.xlu0 %v862, 112
        %v1318 = vpop.permute.xlu0 %1317
        %1319 = vrot.lane.b32.xlu0 %v867, 112
        %v1320 = vpop.permute.xlu0 %1319
        %v1322 = vsel %vm874, %v1318, 0
        %v1325 = vsel %vm874, %v1320, 0
        %1327 = vmatprep.subr.bf16.mxu0 0
        %1328 = vmatpush1.bf16.xpose.msra.mxu0 %v1325
        %1329 = vmatprep.subr.bf16.mxu0 0
        %1330 = vmatpush1.bf16.xpose.msra.mxu0 0
        %1331 = vmatprep.subr.bf16.mxu0 0
        %1332 = vmatpush1.bf16.xpose.msra.mxu0 0
        %1333 = vmatprep.subr.bf16.mxu0 0
        %1334 = vmatpush1.bf16.xpose.msra.mxu0 0
        %1335 = vmatprep.subr.bf16.mxu0 0
        %1336 = vmatpush1.bf16.xpose.msra.mxu0 0
        %1337 = vmatprep.subr.bf16.mxu0 0
        %1338 = vmatpush1.bf16.xpose.msra.mxu0 0
        %1339 = vmatprep.subr.bf16.mxu0 0
        %1340 = vmatpush1.bf16.xpose.msra.mxu0 0
        %1341 = vmatprep.subr.bf16.mxu0 0
        %1342 = vmatpush1.bf16.xpose.msra.mxu0 0
        %1343 = vmatprep.subr.bf16.mxu0 0
        %1344 = vmatpush1.bf16.xpose.msra.mxu0 0
        %1345 = vmatprep.subr.bf16.mxu0 0
        %1346 = vmatpush1.bf16.xpose.msra.mxu0 0
        %1347 = vmatprep.subr.bf16.mxu0 0
        %1348 = vmatpush1.bf16.xpose.msra.mxu0 0
        %1349 = vmatprep.subr.bf16.mxu0 0
        %1350 = vmatpush1.bf16.xpose.msra.mxu0 0
        %1351 = vmatprep.subr.bf16.mxu0 0
        %1352 = vmatpush1.bf16.xpose.msra.mxu0 0
        %1353 = vmatprep.subr.bf16.mxu0 0
        %1354 = vmatpush1.bf16.xpose.msra.mxu0 0
        %1355 = vmatprep.subr.bf16.mxu0 0
        %1356 = vmatpush1.bf16.xpose.msra.mxu0 0
        %1357 = vmatprep.subr.bf16.mxu0 0
        %1358 = vmatpush1.bf16.xpose.msra.mxu0 0
        %1359 = vmatprep.mubr.bf16.mxu0 0
        %1360 = vmatmul.mubr.bf16.gmra.mrb[0].mxu0 %v1322
        %v1361 = vpop.f32.mrb[0].mxu0
        %v1362 = vadd.f32 0.0, %v1361
        %v1363 = vpop.f32.mrb[0].mxu0
        %v1364 = vpop.f32.mrb[0].mxu0
        %v1365 = vpop.f32.mrb[0].mxu0
        %1366 = vdwg.mxu0
        %1367 = vrot.lane.b32.xlu0 %v863, 112
        %v1368 = vpop.permute.xlu0 %1367
        %1369 = vrot.lane.b32.xlu0 %v868, 112
        %v1370 = vpop.permute.xlu0 %1369
        %v1372 = vsel %vm874, %v1368, 0
        %v1375 = vsel %vm874, %v1370, 0
        %1377 = vmatprep.subr.bf16.mxu0 0
        %1378 = vmatpush1.bf16.xpose.msra.mxu0 %v1375
        %1379 = vmatprep.subr.bf16.mxu0 0
        %1380 = vmatpush1.bf16.xpose.msra.mxu0 0
        %1381 = vmatprep.subr.bf16.mxu0 0
        %1382 = vmatpush1.bf16.xpose.msra.mxu0 0
        %1383 = vmatprep.subr.bf16.mxu0 0
        %1384 = vmatpush1.bf16.xpose.msra.mxu0 0
        %1385 = vmatprep.subr.bf16.mxu0 0
        %1386 = vmatpush1.bf16.xpose.msra.mxu0 0
        %1387 = vmatprep.subr.bf16.mxu0 0
        %1388 = vmatpush1.bf16.xpose.msra.mxu0 0
        %1389 = vmatprep.subr.bf16.mxu0 0
        %1390 = vmatpush1.bf16.xpose.msra.mxu0 0
        %1391 = vmatprep.subr.bf16.mxu0 0
        %1392 = vmatpush1.bf16.xpose.msra.mxu0 0
        %1393 = vmatprep.subr.bf16.mxu0 0
        %1394 = vmatpush1.bf16.xpose.msra.mxu0 0
        %1395 = vmatprep.subr.bf16.mxu0 0
        %1396 = vmatpush1.bf16.xpose.msra.mxu0 0
        %1397 = vmatprep.subr.bf16.mxu0 0
        %1398 = vmatpush1.bf16.xpose.msra.mxu0 0
        %1399 = vmatprep.subr.bf16.mxu0 0
        %1400 = vmatpush1.bf16.xpose.msra.mxu0 0
        %1401 = vmatprep.subr.bf16.mxu0 0
        %1402 = vmatpush1.bf16.xpose.msra.mxu0 0
        %1403 = vmatprep.subr.bf16.mxu0 0
        %1404 = vmatpush1.bf16.xpose.msra.mxu0 0
        %1405 = vmatprep.subr.bf16.mxu0 0
        %1406 = vmatpush1.bf16.xpose.msra.mxu0 0
        %1407 = vmatprep.subr.bf16.mxu0 0
        %1408 = vmatpush1.bf16.xpose.msra.mxu0 0
        %1409 = vmatprep.mubr.bf16.mxu0 0
        %1410 = vmatmul.mubr.bf16.gmra.mrb[0].mxu0 %v1372
        %v1411 = vpop.f32.mrb[0].mxu0
        %v1412 = vadd.f32 0.0, %v1411
        %v1413 = vpop.f32.mrb[0].mxu0
        %v1414 = vpop.f32.mrb[0].mxu0
        %v1415 = vpop.f32.mrb[0].mxu0
        %1416 = vdwg.mxu0
        %v1417 = vsel %vm874, %v1362, -inf
        %1418 = vmax.xlane.f32.xlu0 %v1417
        %v1419 = vpop.xlane.xlu0 %1418
        %v1420 = vsel %vm874, %v1412, -inf
        %1421 = vmax.xlane.f32.xlu0 %v1420
        %v1422 = vpop.xlane.xlu0 %1421
        %v1423 = vsub.f32 %v1362, %v1419
        %v1424 = vsub.f32 %v1412, %v1422
        %v1425 = vmul.f32 %v1423, 1.442695
        %v1426 = vpow.pop %v1425
        %v1427 = vmul.f32 %v1424, 1.442695
        %v1428 = vpow.pop %v1427
        %v1429 = vsel %vm874, %v1426, 0.0
        %1430 = vadd.xlane.f32.xlu0 %v1429
        %v1431 = vpop.xlane.xlu0 %1430
        %v1432 = vsel %vm874, %v1428, 0.0
        %1433 = vadd.xlane.f32.xlu0 %v1432
        %v1434 = vpop.xlane.xlu0 %1433
        %v1435 = vrcp.pop %v1431
        %v1436 = vrcp.pop %v1434
        %v1437 = vmul.f32 %v1426, %v1435
        %v1438 = vmul.f32 %v1428, %v1436
        %v1439 = vpack.c.bf16 %v1437, %v1437
        %v1440 = vpack.c.bf16 %v1438, %v1438
        %1441 = vrot.lane.b32.xlu0 %v872, 112
        %v1442 = vpop.permute.xlu0 %1441
        %v1444 = vsel %vm874, %v1439, 0
        %v1447 = vsel %vm994, %v1442, 0
        %1449 = vmatprep.subr.bf16.mxu0 0
        %1450 = vmatpush1.bf16.msra.mxu0 %v1447
        %1451 = vmatprep.subr.bf16.mxu0 0
        %1452 = vmatpush1.bf16.msra.mxu0 0
        %1453 = vmatprep.subr.bf16.mxu0 0
        %1454 = vmatpush1.bf16.msra.mxu0 0
        %1455 = vmatprep.subr.bf16.mxu0 0
        %1456 = vmatpush1.bf16.msra.mxu0 0
        %1457 = vmatprep.subr.bf16.mxu0 0
        %1458 = vmatpush1.bf16.msra.mxu0 0
        %1459 = vmatprep.subr.bf16.mxu0 0
        %1460 = vmatpush1.bf16.msra.mxu0 0
        %1461 = vmatprep.subr.bf16.mxu0 0
        %1462 = vmatpush1.bf16.msra.mxu0 0
        %1463 = vmatprep.subr.bf16.mxu0 0
        %1464 = vmatpush1.bf16.msra.mxu0 0
        %1465 = vmatprep.subr.bf16.mxu0 0
        %1466 = vmatpush1.bf16.msra.mxu0 0
        %1467 = vmatprep.subr.bf16.mxu0 0
        %1468 = vmatpush1.bf16.msra.mxu0 0
        %1469 = vmatprep.subr.bf16.mxu0 0
        %1470 = vmatpush1.bf16.msra.mxu0 0
        %1471 = vmatprep.subr.bf16.mxu0 0
        %1472 = vmatpush1.bf16.msra.mxu0 0
        %1473 = vmatprep.subr.bf16.mxu0 0
        %1474 = vmatpush1.bf16.msra.mxu0 0
        %1475 = vmatprep.subr.bf16.mxu0 0
        %1476 = vmatpush1.bf16.msra.mxu0 0
        %1477 = vmatprep.subr.bf16.mxu0 0
        %1478 = vmatpush1.bf16.msra.mxu0 0
        %1479 = vmatprep.subr.bf16.mxu0 0
        %1480 = vmatpush1.bf16.msra.mxu0 0
        %1481 = vmatprep.mubr.bf16.mxu0 0
        %1482 = vmatmul.mubr.bf16.gmra.mrb[0].mxu0 %v1444
        %v1483 = vpop.f32.mrb[0].mxu0
        %v1484 = vadd.f32 0.0, %v1483
        %v1485 = vpop.f32.mrb[0].mxu0
        %v1486 = vpop.f32.mrb[0].mxu0
        %v1487 = vpop.f32.mrb[0].mxu0
        %1488 = vdwg.mxu0
        %1489 = vrot.lane.b32.xlu0 %v873, 112
        %v1490 = vpop.permute.xlu0 %1489
        %v1492 = vsel %vm874, %v1440, 0
        %v1495 = vsel %vm994, %v1490, 0
        %1497 = vmatprep.subr.bf16.mxu0 0
        %1498 = vmatpush1.bf16.msra.mxu0 %v1495
        %1499 = vmatprep.subr.bf16.mxu0 0
        %1500 = vmatpush1.bf16.msra.mxu0 0
        %1501 = vmatprep.subr.bf16.mxu0 0
        %1502 = vmatpush1.bf16.msra.mxu0 0
        %1503 = vmatprep.subr.bf16.mxu0 0
        %1504 = vmatpush1.bf16.msra.mxu0 0
        %1505 = vmatprep.subr.bf16.mxu0 0
        %1506 = vmatpush1.bf16.msra.mxu0 0
        %1507 = vmatprep.subr.bf16.mxu0 0
        %1508 = vmatpush1.bf16.msra.mxu0 0
        %1509 = vmatprep.subr.bf16.mxu0 0
        %1510 = vmatpush1.bf16.msra.mxu0 0
        %1511 = vmatprep.subr.bf16.mxu0 0
        %1512 = vmatpush1.bf16.msra.mxu0 0
        %1513 = vmatprep.subr.bf16.mxu0 0
        %1514 = vmatpush1.bf16.msra.mxu0 0
        %1515 = vmatprep.subr.bf16.mxu0 0
        %1516 = vmatpush1.bf16.msra.mxu0 0
        %1517 = vmatprep.subr.bf16.mxu0 0
        %1518 = vmatpush1.bf16.msra.mxu0 0
        %1519 = vmatprep.subr.bf16.mxu0 0
        %1520 = vmatpush1.bf16.msra.mxu0 0
        %1521 = vmatprep.subr.bf16.mxu0 0
        %1522 = vmatpush1.bf16.msra.mxu0 0
        %1523 = vmatprep.subr.bf16.mxu0 0
        %1524 = vmatpush1.bf16.msra.mxu0 0
        %1525 = vmatprep.subr.bf16.mxu0 0
        %1526 = vmatpush1.bf16.msra.mxu0 0
        %1527 = vmatprep.subr.bf16.mxu0 0
        %1528 = vmatpush1.bf16.msra.mxu0 0
        %1529 = vmatprep.mubr.bf16.mxu0 0
        %1530 = vmatmul.mubr.bf16.gmra.mrb[0].mxu0 %v1492
        %v1531 = vpop.f32.mrb[0].mxu0
        %v1532 = vadd.f32 0.0, %v1531
        %v1533 = vpop.f32.mrb[0].mxu0
        %v1534 = vpop.f32.mrb[0].mxu0
        %v1535 = vpop.f32.mrb[0].mxu0
        %1536 = vdwg.mxu0
        %1539 = vrot.lane.b32.xlu0 %v1484, 16
        %v1540 = vpop.permute.xlu0 %1539
        %1541 = vrot.lane.b32.xlu0 %v1532, 16
        %v1542 = vpop.permute.xlu0 %1541
        %vm1545 = vcmask 195712
        %1546 = vst.msk [vmem:[#allocation2] sm:$0xff] %vm1545, %v1540
        %1547 = vst.msk [vmem:[#allocation2 + $0x8] sm:$0xff] %vm1545, %v1542
        %1548 = vrot.lane.b32.xlu0 %v862, 104
        %v1549 = vpop.permute.xlu0 %1548
        %1550 = vrot.lane.b32.xlu0 %v867, 104
        %v1551 = vpop.permute.xlu0 %1550
        %v1553 = vsel %vm874, %v1549, 0
        %v1556 = vsel %vm874, %v1551, 0
        %1558 = vmatprep.subr.bf16.mxu0 0
        %1559 = vmatpush1.bf16.xpose.msra.mxu0 %v1556
        %1560 = vmatprep.subr.bf16.mxu0 0
        %1561 = vmatpush1.bf16.xpose.msra.mxu0 0
        %1562 = vmatprep.subr.bf16.mxu0 0
        %1563 = vmatpush1.bf16.xpose.msra.mxu0 0
        %1564 = vmatprep.subr.bf16.mxu0 0
        %1565 = vmatpush1.bf16.xpose.msra.mxu0 0
        %1566 = vmatprep.subr.bf16.mxu0 0
        %1567 = vmatpush1.bf16.xpose.msra.mxu0 0
        %1568 = vmatprep.subr.bf16.mxu0 0
        %1569 = vmatpush1.bf16.xpose.msra.mxu0 0
        %1570 = vmatprep.subr.bf16.mxu0 0
        %1571 = vmatpush1.bf16.xpose.msra.mxu0 0
        %1572 = vmatprep.subr.bf16.mxu0 0
        %1573 = vmatpush1.bf16.xpose.msra.mxu0 0
        %1574 = vmatprep.subr.bf16.mxu0 0
        %1575 = vmatpush1.bf16.xpose.msra.mxu0 0
        %1576 = vmatprep.subr.bf16.mxu0 0
        %1577 = vmatpush1.bf16.xpose.msra.mxu0 0
        %1578 = vmatprep.subr.bf16.mxu0 0
        %1579 = vmatpush1.bf16.xpose.msra.mxu0 0
        %1580 = vmatprep.subr.bf16.mxu0 0
        %1581 = vmatpush1.bf16.xpose.msra.mxu0 0
        %1582 = vmatprep.subr.bf16.mxu0 0
        %1583 = vmatpush1.bf16.xpose.msra.mxu0 0
        %1584 = vmatprep.subr.bf16.mxu0 0
        %1585 = vmatpush1.bf16.xpose.msra.mxu0 0
        %1586 = vmatprep.subr.bf16.mxu0 0
        %1587 = vmatpush1.bf16.xpose.msra.mxu0 0
        %1588 = vmatprep.subr.bf16.mxu0 0
        %1589 = vmatpush1.bf16.xpose.msra.mxu0 0
        %1590 = vmatprep.mubr.bf16.mxu0 0
        %1591 = vmatmul.mubr.bf16.gmra.mrb[0].mxu0 %v1553
        %v1592 = vpop.f32.mrb[0].mxu0
        %v1593 = vadd.f32 0.0, %v1592
        %v1594 = vpop.f32.mrb[0].mxu0
        %v1595 = vpop.f32.mrb[0].mxu0
        %v1596 = vpop.f32.mrb[0].mxu0
        %1597 = vdwg.mxu0
        %1598 = vrot.lane.b32.xlu0 %v863, 104
        %v1599 = vpop.permute.xlu0 %1598
        %1600 = vrot.lane.b32.xlu0 %v868, 104
        %v1601 = vpop.permute.xlu0 %1600
        %v1603 = vsel %vm874, %v1599, 0
        %v1606 = vsel %vm874, %v1601, 0
        %1608 = vmatprep.subr.bf16.mxu0 0
        %1609 = vmatpush1.bf16.xpose.msra.mxu0 %v1606
        %1610 = vmatprep.subr.bf16.mxu0 0
        %1611 = vmatpush1.bf16.xpose.msra.mxu0 0
        %1612 = vmatprep.subr.bf16.mxu0 0
        %1613 = vmatpush1.bf16.xpose.msra.mxu0 0
        %1614 = vmatprep.subr.bf16.mxu0 0
        %1615 = vmatpush1.bf16.xpose.msra.mxu0 0
        %1616 = vmatprep.subr.bf16.mxu0 0
        %1617 = vmatpush1.bf16.xpose.msra.mxu0 0
        %1618 = vmatprep.subr.bf16.mxu0 0
        %1619 = vmatpush1.bf16.xpose.msra.mxu0 0
        %1620 = vmatprep.subr.bf16.mxu0 0
        %1621 = vmatpush1.bf16.xpose.msra.mxu0 0
        %1622 = vmatprep.subr.bf16.mxu0 0
        %1623 = vmatpush1.bf16.xpose.msra.mxu0 0
        %1624 = vmatprep.subr.bf16.mxu0 0
        %1625 = vmatpush1.bf16.xpose.msra.mxu0 0
        %1626 = vmatprep.subr.bf16.mxu0 0
        %1627 = vmatpush1.bf16.xpose.msra.mxu0 0
        %1628 = vmatprep.subr.bf16.mxu0 0
        %1629 = vmatpush1.bf16.xpose.msra.mxu0 0
        %1630 = vmatprep.subr.bf16.mxu0 0
        %1631 = vmatpush1.bf16.xpose.msra.mxu0 0
        %1632 = vmatprep.subr.bf16.mxu0 0
        %1633 = vmatpush1.bf16.xpose.msra.mxu0 0
        %1634 = vmatprep.subr.bf16.mxu0 0
        %1635 = vmatpush1.bf16.xpose.msra.mxu0 0
        %1636 = vmatprep.subr.bf16.mxu0 0
        %1637 = vmatpush1.bf16.xpose.msra.mxu0 0
        %1638 = vmatprep.subr.bf16.mxu0 0
        %1639 = vmatpush1.bf16.xpose.msra.mxu0 0
        %1640 = vmatprep.mubr.bf16.mxu0 0
        %1641 = vmatmul.mubr.bf16.gmra.mrb[0].mxu0 %v1603
        %v1642 = vpop.f32.mrb[0].mxu0
        %v1643 = vadd.f32 0.0, %v1642
        %v1644 = vpop.f32.mrb[0].mxu0
        %v1645 = vpop.f32.mrb[0].mxu0
        %v1646 = vpop.f32.mrb[0].mxu0
        %1647 = vdwg.mxu0
        %v1648 = vsel %vm874, %v1593, -inf
        %1649 = vmax.xlane.f32.xlu0 %v1648
        %v1650 = vpop.xlane.xlu0 %1649
        %v1651 = vsel %vm874, %v1643, -inf
        %1652 = vmax.xlane.f32.xlu0 %v1651
        %v1653 = vpop.xlane.xlu0 %1652
        %v1654 = vsub.f32 %v1593, %v1650
        %v1655 = vsub.f32 %v1643, %v1653
        %v1656 = vmul.f32 %v1654, 1.442695
        %v1657 = vpow.pop %v1656
        %v1658 = vmul.f32 %v1655, 1.442695
        %v1659 = vpow.pop %v1658
        %v1660 = vsel %vm874, %v1657, 0.0
        %1661 = vadd.xlane.f32.xlu0 %v1660
        %v1662 = vpop.xlane.xlu0 %1661
        %v1663 = vsel %vm874, %v1659, 0.0
        %1664 = vadd.xlane.f32.xlu0 %v1663
        %v1665 = vpop.xlane.xlu0 %1664
        %v1666 = vrcp.pop %v1662
        %v1667 = vrcp.pop %v1665
        %v1668 = vmul.f32 %v1657, %v1666
        %v1669 = vmul.f32 %v1659, %v1667
        %v1670 = vpack.c.bf16 %v1668, %v1668
        %v1671 = vpack.c.bf16 %v1669, %v1669
        %1672 = vrot.lane.b32.xlu0 %v872, 104
        %v1673 = vpop.permute.xlu0 %1672
        %v1675 = vsel %vm874, %v1670, 0
        %v1678 = vsel %vm994, %v1673, 0
        %1680 = vmatprep.subr.bf16.mxu0 0
        %1681 = vmatpush1.bf16.msra.mxu0 %v1678
        %1682 = vmatprep.subr.bf16.mxu0 0
        %1683 = vmatpush1.bf16.msra.mxu0 0
        %1684 = vmatprep.subr.bf16.mxu0 0
        %1685 = vmatpush1.bf16.msra.mxu0 0
        %1686 = vmatprep.subr.bf16.mxu0 0
        %1687 = vmatpush1.bf16.msra.mxu0 0
        %1688 = vmatprep.subr.bf16.mxu0 0
        %1689 = vmatpush1.bf16.msra.mxu0 0
        %1690 = vmatprep.subr.bf16.mxu0 0
        %1691 = vmatpush1.bf16.msra.mxu0 0
        %1692 = vmatprep.subr.bf16.mxu0 0
        %1693 = vmatpush1.bf16.msra.mxu0 0
        %1694 = vmatprep.subr.bf16.mxu0 0
        %1695 = vmatpush1.bf16.msra.mxu0 0
        %1696 = vmatprep.subr.bf16.mxu0 0
        %1697 = vmatpush1.bf16.msra.mxu0 0
        %1698 = vmatprep.subr.bf16.mxu0 0
        %1699 = vmatpush1.bf16.msra.mxu0 0
        %1700 = vmatprep.subr.bf16.mxu0 0
        %1701 = vmatpush1.bf16.msra.mxu0 0
        %1702 = vmatprep.subr.bf16.mxu0 0
        %1703 = vmatpush1.bf16.msra.mxu0 0
        %1704 = vmatprep.subr.bf16.mxu0 0
        %1705 = vmatpush1.bf16.msra.mxu0 0
        %1706 = vmatprep.subr.bf16.mxu0 0
        %1707 = vmatpush1.bf16.msra.mxu0 0
        %1708 = vmatprep.subr.bf16.mxu0 0
        %1709 = vmatpush1.bf16.msra.mxu0 0
        %1710 = vmatprep.subr.bf16.mxu0 0
        %1711 = vmatpush1.bf16.msra.mxu0 0
        %1712 = vmatprep.mubr.bf16.mxu0 0
        %1713 = vmatmul.mubr.bf16.gmra.mrb[0].mxu0 %v1675
        %v1714 = vpop.f32.mrb[0].mxu0
        %v1715 = vadd.f32 0.0, %v1714
        %v1716 = vpop.f32.mrb[0].mxu0
        %v1717 = vpop.f32.mrb[0].mxu0
        %v1718 = vpop.f32.mrb[0].mxu0
        %1719 = vdwg.mxu0
        %1720 = vrot.lane.b32.xlu0 %v873, 104
        %v1721 = vpop.permute.xlu0 %1720
        %v1723 = vsel %vm874, %v1671, 0
        %v1726 = vsel %vm994, %v1721, 0
        %1728 = vmatprep.subr.bf16.mxu0 0
        %1729 = vmatpush1.bf16.msra.mxu0 %v1726
        %1730 = vmatprep.subr.bf16.mxu0 0
        %1731 = vmatpush1.bf16.msra.mxu0 0
        %1732 = vmatprep.subr.bf16.mxu0 0
        %1733 = vmatpush1.bf16.msra.mxu0 0
        %1734 = vmatprep.subr.bf16.mxu0 0
        %1735 = vmatpush1.bf16.msra.mxu0 0
        %1736 = vmatprep.subr.bf16.mxu0 0
        %1737 = vmatpush1.bf16.msra.mxu0 0
        %1738 = vmatprep.subr.bf16.mxu0 0
        %1739 = vmatpush1.bf16.msra.mxu0 0
        %1740 = vmatprep.subr.bf16.mxu0 0
        %1741 = vmatpush1.bf16.msra.mxu0 0
        %1742 = vmatprep.subr.bf16.mxu0 0
        %1743 = vmatpush1.bf16.msra.mxu0 0
        %1744 = vmatprep.subr.bf16.mxu0 0
        %1745 = vmatpush1.bf16.msra.mxu0 0
        %1746 = vmatprep.subr.bf16.mxu0 0
        %1747 = vmatpush1.bf16.msra.mxu0 0
        %1748 = vmatprep.subr.bf16.mxu0 0
        %1749 = vmatpush1.bf16.msra.mxu0 0
        %1750 = vmatprep.subr.bf16.mxu0 0
        %1751 = vmatpush1.bf16.msra.mxu0 0
        %1752 = vmatprep.subr.bf16.mxu0 0
        %1753 = vmatpush1.bf16.msra.mxu0 0
        %1754 = vmatprep.subr.bf16.mxu0 0
        %1755 = vmatpush1.bf16.msra.mxu0 0
        %1756 = vmatprep.subr.bf16.mxu0 0
        %1757 = vmatpush1.bf16.msra.mxu0 0
        %1758 = vmatprep.subr.bf16.mxu0 0
        %1759 = vmatpush1.bf16.msra.mxu0 0
        %1760 = vmatprep.mubr.bf16.mxu0 0
        %1761 = vmatmul.mubr.bf16.gmra.mrb[0].mxu0 %v1723
        %v1762 = vpop.f32.mrb[0].mxu0
        %v1763 = vadd.f32 0.0, %v1762
        %v1764 = vpop.f32.mrb[0].mxu0
        %v1765 = vpop.f32.mrb[0].mxu0
        %v1766 = vpop.f32.mrb[0].mxu0
        %1767 = vdwg.mxu0
        %1770 = vrot.lane.b32.xlu0 %v1715, 24
        %v1771 = vpop.permute.xlu0 %1770
        %1772 = vrot.lane.b32.xlu0 %v1763, 24
        %v1773 = vpop.permute.xlu0 %1772
        %vm1776 = vcmask 261312
        %1777 = vst.msk [vmem:[#allocation2] sm:$0xff] %vm1776, %v1771
        %1778 = vst.msk [vmem:[#allocation2 + $0x8] sm:$0xff] %vm1776, %v1773
        %v1779 = vld [vmem:[#allocation2] sm:$0xff]
        %v1780 = vld [vmem:[#allocation2 + $0x8] sm:$0xff]
        %v1781 = vpack.c.bf16 %v1780, %v1779
        %v1782 = vld [vmem:[#allocation11] sm:$0xf]
        %v1783 = vld [vmem:[#allocation11 + $0x4] sm:$0xf]
        %v1784 = vld [vmem:[#allocation11 + $0x8] sm:$0xf]
        %v1785 = vld [vmem:[#allocation11 + $0xc] sm:$0xf]
        %v1786 = vld [vmem:[%s7] sm:$0x1]
        %v1788 = vlaneseq
        %v1789 = vshrl.u32 %v1788, 7
        %v1790 = vsub.s32 0, %v1789
        %v1791 = vrot.slane %v1786, %v1790
        %v1797 = vunpack.c.l.b16 %v1782
        %v1798 = vunpack.c.l.b16 %v1783
        %v1799 = vunpack.c.l.b16 %v1784
        %v1800 = vunpack.c.l.b16 %v1785
        %v1801 = vpack.c.b16 %v1798, %v1797
        %v1802 = vpack.c.b16 %v1800, %v1799
        %v1806 = vsel %vm686, %v1781, 0
        %1808 = vmatprep.subr.bf16.mxu0 0
        %1809 = vmatpush1.bf16.msra.mxu0 %v1801
        %1810 = vmatprep.subr.bf16.mxu0 0
        %1811 = vmatpush1.bf16.msra.mxu0 %v1802
        %1812 = vmatprep.subr.bf16.mxu0 0
        %1813 = vmatpush1.bf16.msra.mxu0 0
        %1814 = vmatprep.subr.bf16.mxu0 0
        %1815 = vmatpush1.bf16.msra.mxu0 0
        %1816 = vmatprep.subr.bf16.mxu0 0
        %1817 = vmatpush1.bf16.msra.mxu0 0
        %1818 = vmatprep.subr.bf16.mxu0 0
        %1819 = vmatpush1.bf16.msra.mxu0 0
        %1820 = vmatprep.subr.bf16.mxu0 0
        %1821 = vmatpush1.bf16.msra.mxu0 0
        %1822 = vmatprep.subr.bf16.mxu0 0
        %1823 = vmatpush1.bf16.msra.mxu0 0
        %1824 = vmatprep.subr.bf16.mxu0 0
        %1825 = vmatpush1.bf16.msra.mxu0 0
        %1826 = vmatprep.subr.bf16.mxu0 0
        %1827 = vmatpush1.bf16.msra.mxu0 0
        %1828 = vmatprep.subr.bf16.mxu0 0
        %1829 = vmatpush1.bf16.msra.mxu0 0
        %1830 = vmatprep.subr.bf16.mxu0 0
        %1831 = vmatpush1.bf16.msra.mxu0 0
        %1832 = vmatprep.subr.bf16.mxu0 0
        %1833 = vmatpush1.bf16.msra.mxu0 0
        %1834 = vmatprep.subr.bf16.mxu0 0
        %1835 = vmatpush1.bf16.msra.mxu0 0
        %1836 = vmatprep.subr.bf16.mxu0 0
        %1837 = vmatpush1.bf16.msra.mxu0 0
        %1838 = vmatprep.subr.bf16.mxu0 0
        %1839 = vmatpush1.bf16.msra.mxu0 0
        %1840 = vmatprep.mubr.bf16.mxu0 0
        %1841 = vmatmul.mubr.bf16.gmra.mrb[0].mxu0 %v1806
        %v1842 = vpop.f32.mrb[0].mxu0
        %v1843 = vadd.f32 %v1791, %v1842
        %v1844 = vpop.f32.mrb[0].mxu0
        %v1845 = vpop.f32.mrb[0].mxu0
        %v1846 = vadd.f32 %v1791, %v1845
        %v1847 = vpop.f32.mrb[0].mxu0
        %1848 = vdwg.mxu0
        %v1849 = vadd.f32 %v1843, %v658
        %v1850 = vadd.f32 %v1846, %v659
        %v1851 = vld [vmem:[%s8] sm:$0x1]
        %v1852 = vld [vmem:[#allocation12] sm:$0x1]
        %v1853 = vsel %vm686, %v1849, 0.0
        %1854 = vadd.xlane.f32.xlu0 %v1853
        %v1855 = vpop.xlane.xlu0 %1854
        %v1856 = vsel %vm686, %v1850, 0.0
        %1857 = vadd.xlane.f32.xlu0 %v1856
        %v1858 = vpop.xlane.xlu0 %1857
        %v1859 = vrcp.pop 32.0
        %v1860 = vmul.f32 %v1855, %v1859
        %v1861 = vmul.f32 %v1858, %v1859
        %v1862 = vsub.f32 %v1849, %v1860
        %v1863 = vsub.f32 %v1850, %v1861
        %v1864 = vmul.f32 %v1862, %v1862
        %v1865 = vmul.f32 %v1863, %v1863
        %v1866 = vsel %vm686, %v1864, 0.0
        %1867 = vadd.xlane.f32.xlu0 %v1866
        %v1868 = vpop.xlane.xlu0 %1867
        %v1869 = vsel %vm686, %v1865, 0.0
        %1870 = vadd.xlane.f32.xlu0 %v1869
        %v1871 = vpop.xlane.xlu0 %1870
        %v1872 = vmul.f32 %v1868, %v1859
        %v1873 = vmul.f32 %v1871, %v1859
        %v1874 = vadd.f32 %v1872, 1e-05
        %v1875 = vadd.f32 %v1873, 1e-05
        %v1876 = vrsqrt.pop %v1874
        %v1877 = vrsqrt.pop %v1875
        %v1878 = vmul.f32 %v1862, %v1876
        %v1879 = vmul.f32 %v1863, %v1877
        %v1881 = vlaneseq
        %v1882 = vshrl.u32 %v1881, 7
        %v1883 = vsub.s32 0, %v1882
        %v1884 = vrot.slane %v1851, %v1883
        %v1886 = vmul.f32 %v1878, %v1884
        %v1887 = vmul.f32 %v1879, %v1884
        %v1889 = vlaneseq
        %v1890 = vshrl.u32 %v1889, 7
        %v1891 = vsub.s32 0, %v1890
        %v1892 = vrot.slane %v1852, %v1891
        %v1894 = vadd.f32 %v1886, %v1892
        %v1895 = vadd.f32 %v1887, %v1892
        %v1896 = vpack.c.bf16 %v1895, %v1894
        %v1897 = vld [vmem:[%s10] sm:$0xf]
        %v1898 = vld [vmem:[%s10 + $0x4] sm:$0xf]
        %v1899 = vld [vmem:[%s10 + $0x8] sm:$0xf]
        %v1900 = vld [vmem:[%s10 + $0xc] sm:$0xf]
        %v1901 = vld [vmem:[%s11] sm:$0x1]
        %v1903 = vlaneseq
        %v1904 = vshrl.u32 %v1903, 7
        %v1905 = vsub.s32 0, %v1904
        %v1906 = vrot.slane %v1901, %v1905
        %v1912 = vunpack.c.l.b16 %v1897
        %v1913 = vunpack.c.l.b16 %v1898
        %v1914 = vunpack.c.l.b16 %v1899
        %v1915 = vunpack.c.l.b16 %v1900
        %v1916 = vpack.c.b16 %v1913, %v1912
        %v1917 = vpack.c.b16 %v1915, %v1914
        %v1921 = vsel %vm686, %v1896, 0
        %1923 = vmatprep.subr.bf16.mxu0 0
        %1924 = vmatpush1.bf16.msra.mxu0 %v1916
        %1925 = vmatprep.subr.bf16.mxu0 0
        %1926 = vmatpush1.bf16.msra.mxu0 %v1917
        %1927 = vmatprep.subr.bf16.mxu0 0
        %1928 = vmatpush1.bf16.msra.mxu0 0
        %1929 = vmatprep.subr.bf16.mxu0 0
        %1930 = vmatpush1.bf16.msra.mxu0 0
        %1931 = vmatprep.subr.bf16.mxu0 0
        %1932 = vmatpush1.bf16.msra.mxu0 0
        %1933 = vmatprep.subr.bf16.mxu0 0
        %1934 = vmatpush1.bf16.msra.mxu0 0
        %1935 = vmatprep.subr.bf16.mxu0 0
        %1936 = vmatpush1.bf16.msra.mxu0 0
        %1937 = vmatprep.subr.bf16.mxu0 0
        %1938 = vmatpush1.bf16.msra.mxu0 0
        %1939 = vmatprep.subr.bf16.mxu0 0
        %1940 = vmatpush1.bf16.msra.mxu0 0
        %1941 = vmatprep.subr.bf16.mxu0 0
        %1942 = vmatpush1.bf16.msra.mxu0 0
        %1943 = vmatprep.subr.bf16.mxu0 0
        %1944 = vmatpush1.bf16.msra.mxu0 0
        %1945 = vmatprep.subr.bf16.mxu0 0
        %1946 = vmatpush1.bf16.msra.mxu0 0
        %1947 = vmatprep.subr.bf16.mxu0 0
        %1948 = vmatpush1.bf16.msra.mxu0 0
        %1949 = vmatprep.subr.bf16.mxu0 0
        %1950 = vmatpush1.bf16.msra.mxu0 0
        %1951 = vmatprep.subr.bf16.mxu0 0
        %1952 = vmatpush1.bf16.msra.mxu0 0
        %1953 = vmatprep.subr.bf16.mxu0 0
        %1954 = vmatpush1.bf16.msra.mxu0 0
        %1955 = vmatprep.mubr.bf16.mxu0 0
        %1956 = vmatmul.mubr.bf16.gmra.mrb[0].mxu0 %v1921
        %v1957 = vpop.f32.mrb[0].mxu0
        %v1958 = vadd.f32 %v1906, %v1957
        %v1959 = vpop.f32.mrb[0].mxu0
        %v1960 = vpop.f32.mrb[0].mxu0
        %v1961 = vadd.f32 %v1906, %v1960
        %v1962 = vpop.f32.mrb[0].mxu0
        %1963 = vdwg.mxu0
        %v1964 = vmax.f32 %v1958, 0.0
        %v1965 = vmax.f32 %v1961, 0.0
        %v1966 = vpack.c.bf16 %v1965, %v1964
        %v1967 = vld [vmem:[%s12] sm:$0xf]
        %v1968 = vld [vmem:[%s12 + $0x4] sm:$0xf]
        %v1969 = vld [vmem:[%s12 + $0x8] sm:$0xf]
        %v1970 = vld [vmem:[%s12 + $0xc] sm:$0xf]
        %v1971 = vld [vmem:[%s12 + $0x10] sm:$0xf]
        %v1972 = vld [vmem:[%s12 + $0x14] sm:$0xf]
        %v1973 = vld [vmem:[%s12 + $0x18] sm:$0xf]
        %v1974 = vld [vmem:[%s12 + $0x1c] sm:$0xf]
        %v1975 = vld [vmem:[%s13] sm:$0x1]
        %v1977 = vlaneseq
        %v1978 = vshrl.u32 %v1977, 7
        %v1979 = vsub.s32 0, %v1978
        %v1980 = vrot.slane %v1975, %v1979
        %v1990 = vunpack.c.l.b16 %v1967
        %v1991 = vunpack.c.l.b16 %v1968
        %v1992 = vunpack.c.l.b16 %v1969
        %v1993 = vunpack.c.l.b16 %v1970
        %v1994 = vunpack.c.l.b16 %v1971
        %v1995 = vunpack.c.l.b16 %v1972
        %v1996 = vunpack.c.l.b16 %v1973
        %v1997 = vunpack.c.l.b16 %v1974
        %v1998 = vpack.c.b16 %v1991, %v1990
        %v1999 = vpack.c.b16 %v1993, %v1992
        %v2000 = vpack.c.b16 %v1995, %v1994
        %v2001 = vpack.c.b16 %v1997, %v1996
        %vm2006 = vcmask 523264
        %v2008 = vsel %vm2006, %v1966, 0
        %2010 = vmatprep.subr.bf16.mxu0 0
        %2011 = vmatpush1.bf16.msra.mxu0 %v1998
        %2012 = vmatprep.subr.bf16.mxu0 0
        %2013 = vmatpush1.bf16.msra.mxu0 %v1999
        %2014 = vmatprep.subr.bf16.mxu0 0
        %2015 = vmatpush1.bf16.msra.mxu0 %v2000
        %2016 = vmatprep.subr.bf16.mxu0 0
        %2017 = vmatpush1.bf16.msra.mxu0 %v2001
        %2018 = vmatprep.subr.bf16.mxu0 0
        %2019 = vmatpush1.bf16.msra.mxu0 0
        %2020 = vmatprep.subr.bf16.mxu0 0
        %2021 = vmatpush1.bf16.msra.mxu0 0
        %2022 = vmatprep.subr.bf16.mxu0 0
        %2023 = vmatpush1.bf16.msra.mxu0 0
        %2024 = vmatprep.subr.bf16.mxu0 0
        %2025 = vmatpush1.bf16.msra.mxu0 0
        %2026 = vmatprep.subr.bf16.mxu0 0
        %2027 = vmatpush1.bf16.msra.mxu0 0
        %2028 = vmatprep.subr.bf16.mxu0 0
        %2029 = vmatpush1.bf16.msra.mxu0 0
        %2030 = vmatprep.subr.bf16.mxu0 0
        %2031 = vmatpush1.bf16.msra.mxu0 0
        %2032 = vmatprep.subr.bf16.mxu0 0
        %2033 = vmatpush1.bf16.msra.mxu0 0
        %2034 = vmatprep.subr.bf16.mxu0 0
        %2035 = vmatpush1.bf16.msra.mxu0 0
        %2036 = vmatprep.subr.bf16.mxu0 0
        %2037 = vmatpush1.bf16.msra.mxu0 0
        %2038 = vmatprep.subr.bf16.mxu0 0
        %2039 = vmatpush1.bf16.msra.mxu0 0
        %2040 = vmatprep.subr.bf16.mxu0 0
        %2041 = vmatpush1.bf16.msra.mxu0 0
        %2042 = vmatprep.mubr.bf16.mxu0 0
        %2043 = vmatmul.mubr.bf16.gmra.mrb[0].mxu0 %v2008
        %v2044 = vpop.f32.mrb[0].mxu0
        %v2045 = vadd.f32 %v1980, %v2044
        %v2046 = vpop.f32.mrb[0].mxu0
        %v2047 = vpop.f32.mrb[0].mxu0
        %v2048 = vadd.f32 %v1980, %v2047
        %v2049 = vpop.f32.mrb[0].mxu0
        %2050 = vdwg.mxu0
        %v2051 = vadd.f32 %v2045, %v1894
        %v2052 = vadd.f32 %v2048, %v1895
        %v2053 = vld [vmem:[%s14] sm:$0x1]
        %v2054 = vld [vmem:[%s15] sm:$0x1]
        %v2055 = vsel %vm686, %v2051, 0.0
        %2056 = vadd.xlane.f32.xlu0 %v2055
        %v2057 = vpop.xlane.xlu0 %2056
        %v2058 = vsel %vm686, %v2052, 0.0
        %2059 = vadd.xlane.f32.xlu0 %v2058
        %v2060 = vpop.xlane.xlu0 %2059
        %v2061 = vmul.f32 %v2057, %v1859
        %v2062 = vmul.f32 %v2060, %v1859
        %v2063 = vsub.f32 %v2051, %v2061
        %v2064 = vsub.f32 %v2052, %v2062
        %v2065 = vmul.f32 %v2063, %v2063
        %v2066 = vmul.f32 %v2064, %v2064
        %v2067 = vsel %vm686, %v2065, 0.0
        %2068 = vadd.xlane.f32.xlu0 %v2067
        %v2069 = vpop.xlane.xlu0 %2068
        %v2070 = vsel %vm686, %v2066, 0.0
        %2071 = vadd.xlane.f32.xlu0 %v2070
        %v2072 = vpop.xlane.xlu0 %2071
        %v2073 = vmul.f32 %v2069, %v1859
        %v2074 = vmul.f32 %v2072, %v1859
        %v2075 = vadd.f32 %v2073, 1e-05
        %v2076 = vadd.f32 %v2074, 1e-05
        %v2077 = vrsqrt.pop %v2075
        %v2078 = vrsqrt.pop %v2076
        %v2079 = vmul.f32 %v2063, %v2077
        %v2080 = vmul.f32 %v2064, %v2078
        %v2082 = vlaneseq
        %v2083 = vshrl.u32 %v2082, 7
        %v2084 = vsub.s32 0, %v2083
        %v2085 = vrot.slane %v2053, %v2084
        %v2087 = vmul.f32 %v2079, %v2085
        %v2088 = vmul.f32 %v2080, %v2085
        %v2090 = vlaneseq
        %v2091 = vshrl.u32 %v2090, 7
        %v2092 = vsub.s32 0, %v2091
        %v2093 = vrot.slane %v2054, %v2092
        %v2095 = vadd.f32 %v2087, %v2093
        %v2096 = vadd.f32 %v2088, %v2093
        %2097 = vst.msk [vmem:[%s642] sm:$0xff] %vm686, %v2095
        %2098 = vst.msk [vmem:[%s642 + $0x8] sm:$0xff] %vm686, %v2096
        %s2099 = sand.u32 %s395, 1
        %s2100 = scalar_lea.sflag [#allocation5], %s2099
        %s2101 = sand.u32 %s395, 1
        %s2102 = smul.addr %s2101, 16
        %s2103 = scalar_lea.vmem [#allocation14], %s2102
        // Predicated region
        $region109: #{tpu_custom_call.1} parent=83 // pred_check
          %p2104 = pneg %p405
        $region110: #{tpu_custom_call.1} parent=83 // pred_check_branch
          %2106 = sbr.rel (%p2104) target = $region112
        $region111: #{tpu_custom_call.1} parent=83 // pred_region
          %s2107 = smul.u32 2, %s36
          %s2109 = ssub.s32 256, 256
          %2110 = vsyncadd %s2100, %s2109
          %s2111 = smul.addr %s2107, 128
          %s2112 = scalar_lea.hbm %s16, %s2111
          %s2113 = sshll.u32 %s2103, 4
          %s2114 = int_to_ptr.vmem [resolvable:$true] %s2113
          %2119 = dma.vmem_to_hbm [thread:$0]  %s2114, 256, %s2112, %s2100, 128, 128, 8
        $region112: #{tpu_custom_call.1} parent=83 // pred_fallthru
          _
      $region84: #{tpu_custom_call.1} parent=5 // pred_fallthru
        _
      %p2120 = scmp.le.s32.totalorder 2, %s31
      // Predicated region
      $region113: #{tpu_custom_call.1} parent=5 // pred_check
        %p2121 = pneg %p2120
      $region114: #{tpu_custom_call.1} parent=5 // pred_check_branch
        %2123 = sbr.rel (%p2121) target = $region116
      $region115: #{tpu_custom_call.1} parent=5 // pred_region
        %s2124 = ssub.s32 %s31, 2
        // Predicated region
        $region117: #{tpu_custom_call.1} parent=115 // pred_check
          %p2125 = pneg %p411
        $region118: #{tpu_custom_call.1} parent=115 // pred_check_branch
          %2127 = sbr.rel (%p2125) target = $region120
        $region119: #{tpu_custom_call.1} parent=115 // pred_region
          %s2128 = sand.u32 %s396, 1
          %s2129 = scalar_lea.sflag [#allocation5], %s2128
          %s2130 = sand.u32 %s396, 1
          %s2131 = smul.addr %s2130, 16
          %s2132 = scalar_lea.vmem [#allocation14], %s2131
          %2133 = dma.done %s2129, 256
        $region120: #{tpu_custom_call.1} parent=115 // pred_fallthru
          _
      $region116: #{tpu_custom_call.1} parent=5 // pred_fallthru
        _
    $region6: #{tpu_custom_call.1} parent=1 // loop_footer
      %s35 = sadd.s32 1, %s31
    $region7: #{tpu_custom_call.1} parent=1 // loop_footer_branch
      %30 = sbr.rel target = $region3
    $region8: #{tpu_custom_call.1} parent=1 // loop_exit
      _
    %2134 = vsyncpa [#allocation4], 1
    %s2135 = scalar_lea.sflag [#allocation4], 1
    %2136 = vsyncpa %s2135, 1
    %2137 = vsyncpa [#allocation7], 1
    %2138 = vsyncpa [#allocation10], 1
    %2139 = vsyncpa [#allocation13], 1
    %2140 = vsyncpa [#allocation5], 1
    %s2141 = scalar_lea.sflag [#allocation5], 1
    %2142 = vsyncpa %s2141, 1

</llo_original>
